<compile_context>
chip_gen: v7x
topology: tpu7x:2x2x1
jax: 0.10.0
libtpu: 0.0.40
codegen_flags: <defaults>
</compile_context>

<pallas_src>
import functools

import jax
import jax.numpy as jnp
from jax import lax
from jax.experimental import pallas as pl
from jax.experimental.pallas import tpu as pltpu
import numpy as np


def _round_up(x, m):
    return ((x + m - 1) // m) * m


# ----------------------------- Pallas kernel --------------------------------

def render_trans_kernel(xh_m_ref, xh_h_ref, xle_m_ref, xle_h_ref, xlo_ref,
                        w_ref, bias_ref, out_ref,
                        slab_h, slab_le, patch,
                        *, tile_h, wh, c_high, c_low):
    """One (batch, output-row-tile) grid step.

    xh_m_ref  : (1, TH,   WH+2, C_high)      bf16  main rows of padded x_high
    xh_h_ref  : (1, 2,    WH+2, C_high)      bf16  2 halo rows below the tile
    xle_m_ref : (1, TH,   WH+1, 2*C_low)     bf16  even-row phase of padded x_low
    xle_h_ref : (1, 1,    WH+1, 2*C_low)     bf16  1 halo row of the even phase
    xlo_ref   : (1, TH,   WH+1, 2*C_low)     bf16  odd-row phase of padded x_low
    w_ref     : (1, 9*(C_high+C_low), C_pad) bf16  [w3*s_high*v[b] ; ws*s_up]
    bias_ref  : (1, 1, C_pad)                f32   b_up + b_high * v[b]
    out_ref   : (1, 1, TH*WH, C_pad)         bf16
    """
    th = tile_h
    m = th * wh

    # Stitch the halo rows onto the main tile (one small VMEM copy each).
    slab_h[0:th, :, :] = xh_m_ref[0]
    slab_h[th:th + 2, :, :] = xh_h_ref[0]
    slab_le[0:th, :, :] = xle_m_ref[0]
    slab_le[th:th + 1, :, :] = xle_h_ref[0]

    # x_high 3x3 / stride-1 taps -> patch columns [0, 9*C_high)
    for dy in range(3):
        for dx in range(3):
            t = dy * 3 + dx
            patch[:, t * c_high:(t + 1) * c_high] = (
                slab_h[dy:dy + th, dx:dx + wh, :].reshape(m, c_high))

    # x_low 3x3 / stride-2 taps -> patch columns [9*C_high, 9*(C_high+C_low)).
    # stride-2 is unit-stride here thanks to the even/odd row phases and the
    # column-pair -> channel fold done in the wrapper.
    base = 9 * c_high
    for dy in range(3):
        for dx in range(3):
            t = dy * 3 + dx
            co = 1 if dx == 2 else 0
            ch = c_low if dx == 1 else 0
            if dy == 1:
                xs = xlo_ref[0, 0:th, co:co + wh, ch:ch + c_low]
            else:
                ro = 1 if dy == 2 else 0
                xs = slab_le[ro:ro + th, co:co + wh, ch:ch + c_low]
            patch[:, base + t * c_low: base + (t + 1) * c_low] = (
                xs.reshape(m, c_low))

    # One MXU matmul for both convolutions (v and BN scales folded into w).
    acc = jnp.dot(patch[...], w_ref[0], preferred_element_type=jnp.float32)
    out_ref[0, 0] = jnp.maximum(acc + bias_ref[0], 0.0).astype(out_ref.dtype)


# ----------------------------- JAX glue --------------------------------------

def _conv_weight_to_matmul(w):
    """(C_out, C_in, K, K) OIHW -> (K*K*C_in, C_out), tap-major (dy, dx, ci)."""
    c_out, c_in, kh, kw = w.shape
    return jnp.transpose(w, (2, 3, 1, 0)).reshape(kh * kw * c_in, c_out)


def _fold_bn(gamma, beta, mean, var, eps=1e-5):
    scale = gamma / jnp.sqrt(var + eps)
    bias = beta - mean * scale
    return scale, bias


def _vmem_estimate(tile_h, wh, whp, wh1, c_high, c_low, c_pad, k_tot):
    m = tile_h * wh
    xh_main = tile_h * whp * c_high * 2
    xh_halo = 2 * whp * c_high * 2
    xle_main = tile_h * wh1 * 2 * c_low * 2
    xle_halo = wh1 * 2 * c_low * 2
    xlo_main = tile_h * wh1 * 2 * c_low * 2
    wcat = k_tot * c_pad * 2
    bias = c_pad * 4
    out_blk = m * c_pad * 2
    pipelined = 2 * (xh_main + xh_halo + xle_main + xle_halo + xlo_main
                     + wcat + bias + out_blk)          # double-buffered blocks
    scratch = ((tile_h + 2) * whp * c_high * 2
               + (tile_h + 1) * wh1 * 2 * c_low * 2
               + m * k_tot * 2)
    interm = m * c_pad * 4                              # f32 matmul result
    return pipelined + scratch + interm


def _pick_tile_rows(hh, batch, wh, whp, wh1, c_high, c_low, c_pad, k_tot,
                    budget):
    th = _round_up(hh, 8)
    if batch == 1 and hh >= 16:
        # keep >= 2 row tiles so both v7x TensorCores get balanced work
        th = min(th, max(8, _round_up(-(-hh // 2), 8)))
    while th > 8 and _vmem_estimate(th, wh, whp, wh1, c_high, c_low,
                                    c_pad, k_tot) > budget:
        th -= 8
    return max(th, 8)


@jax.jit
def render_trans_forward(x_high_nchw, x_low_nchw, params):
    """RenderTrans.forward (upsample=True path). NCHW in, NCHW out (f32)."""
    b, c_low, h, w = x_low_nchw.shape
    _, c_high, hh, wh = x_high_nchw.shape
    # stride-2 conv output spatial must match x_high spatial for the residual add
    assert hh == (h - 1) // 2 + 1 and wh == (w - 1) // 2 + 1, (hh, wh, h, w)
    assert h == 2 * hh and w == 2 * wh, "even x_low spatial sizes expected"
    # TODO(synk): odd x_low spatial sizes (stride-2 phase split assumes even H/W).

    x_low = jnp.transpose(x_low_nchw, (0, 2, 3, 1))    # (B, H, W, C_low)
    x_high = jnp.transpose(x_high_nchw, (0, 2, 3, 1))  # (B, HH, WH, C_high)
    # TODO(synk): keep the surrounding model NHWC to drop these layout passes.

    s_low, b_low = _fold_bn(*params["bn_low"])
    s_high, b_high = _fold_bn(*params["bn_high"])
    s_up, b_up = _fold_bn(*params["bn_up"])

    # ---- hoisted global-average-pool branch (tiny; plain JAX, f32) ----------
    w1 = jnp.transpose(params["conv1x1_w"][:, :, 0, 0], (1, 0))   # (C_low, C_high)
    gp = jnp.mean(x_low, axis=(1, 2))                             # (B, C_low)
    v = jax.nn.relu(gp @ w1 * s_low[None, :] + b_low[None, :])    # (B, C_high)

    # ---- lane-pad output channels; fold BN scales and v into the weights ----
    c_pad = _round_up(c_high, 128)
    pad_c = c_pad - c_high
    v_pad = jnp.pad(v, ((0, 0), (0, pad_c)))                      # (B, C_pad)
    bias_tot = (jnp.pad(b_up, (0, pad_c))[None, :]
                + jnp.pad(b_high, (0, pad_c))[None, :] * v_pad)
    bias_tot = bias_tot[:, None, :].astype(jnp.float32)           # (B, 1, C_pad)

    w3m = _conv_weight_to_matmul(params["conv3x3_w"]) * s_high[None, :]
    wsm = _conv_weight_to_matmul(params["str_w"]) * s_up[None, :]
    w3m = jnp.pad(w3m, ((0, 0), (0, pad_c)))                      # (9*C_high, C_pad)
    wsm = jnp.pad(wsm, ((0, 0), (0, pad_c)))                      # (9*C_low, C_pad)
    w3v = w3m[None, :, :] * v_pad[:, None, :]                     # (B, 9*C_high, C_pad)
    wcat = jnp.concatenate(
        [w3v, jnp.broadcast_to(wsm[None], (b,) + wsm.shape)], axis=1
    ).astype(jnp.bfloat16)                                        # (B, K_tot, C_pad)
    k_tot = 9 * c_high + 9 * c_low

    # ---- generation-aware VMEM budget / row-tile size ------------------------
    try:
        phys_vmem = int(pltpu.get_tpu_info().vmem_capacity_bytes)
    except Exception:
        phys_vmem = 64 << 20
    vmem_limit = max(32 << 20, min(int(phys_vmem * 0.75), 112 << 20))
    whp, wh1 = wh + 2, wh + 1
    tile_h = _pick_tile_rows(hh, b, wh, whp, wh1, c_high, c_low, c_pad, k_tot,
                             int(vmem_limit * 0.8))
    n_tiles = -(-hh // tile_h)
    hh_pad = n_tiles * tile_h
    m = tile_h * wh

    # ---- padded NHWC inputs (no im2col; taps gathered inside the kernel) -----
    xh_p = jnp.pad(x_high, ((0, 0), (1, hh_pad + 1 - hh), (1, 1), (0, 0))
                   ).astype(jnp.bfloat16)                 # (B, HHp+2, WH+2, C_high)
    xlp = jnp.pad(x_low, ((0, 0), (1, 2 * hh_pad + 1 - h), (1, 1), (0, 0)))
    xlp = xlp.reshape(b, hh_pad + 1, 2, wh + 1, 2, c_low)
    xle = xlp[:, :, 0].reshape(b, hh_pad + 1, wh1, 2 * c_low).astype(jnp.bfloat16)
    xlo = xlp[:, :, 1].reshape(b, hh_pad + 1, wh1, 2 * c_low).astype(jnp.bfloat16)

    kernel = functools.partial(render_trans_kernel, tile_h=tile_h, wh=wh,
                               c_high=c_high, c_low=c_low)

    cost = pl.CostEstimate(
        flops=2 * b * hh_pad * wh * k_tot * c_pad,
        transcendentals=0,
        bytes_accessed=int(b * (hh_pad + 2) * whp * c_high * 2
                           + 2 * b * (hh_pad + 1) * wh1 * 2 * c_low * 2
                           + b * k_tot * c_pad * 2 + b * c_pad * 4
                           + b * hh_pad * wh * c_pad * 2))

    out_pad = pl.pallas_call(
        kernel,
        out_shape=jax.ShapeDtypeStruct((b, n_tiles, m, c_pad), jnp.bfloat16),
        grid_spec=pltpu.PrefetchScalarGridSpec(
            num_scalar_prefetch=0,
            grid=(b, n_tiles),
            in_specs=[
                # x_high: main row tile + 2-row halo (same array passed twice)
                pl.BlockSpec((1, tile_h, whp, c_high),
                             lambda i, s: (i, s, 0, 0)),
                pl.BlockSpec((1, 2, whp, c_high),
                             lambda i, s: (i, (s + 1) * (tile_h // 2), 0, 0)),
                # x_low even-row phase: main + 1-row halo
                pl.BlockSpec((1, tile_h, wh1, 2 * c_low),
                             lambda i, s: (i, s, 0, 0)),
                pl.BlockSpec((1, 1, wh1, 2 * c_low),
                             lambda i, s: (i, (s + 1) * tile_h, 0, 0)),
                # x_low odd-row phase (no halo needed)
                pl.BlockSpec((1, tile_h, wh1, 2 * c_low),
                             lambda i, s: (i, s, 0, 0)),
                # concatenated, BN/v-folded weights (per batch) and bias
                pl.BlockSpec((1, k_tot, c_pad), lambda i, s: (i, 0, 0)),
                pl.BlockSpec((1, 1, c_pad), lambda i, s: (i, 0, 0)),
            ],
            out_specs=pl.BlockSpec((1, 1, m, c_pad), lambda i, s: (i, s, 0, 0)),
            scratch_shapes=[
                pltpu.VMEM((tile_h + 2, whp, c_high), jnp.bfloat16),     # slab_h
                pltpu.VMEM((tile_h + 1, wh1, 2 * c_low), jnp.bfloat16),  # slab_le
                pltpu.VMEM((m, k_tot), jnp.bfloat16),                    # patch
            ]),
        compiler_params=pltpu.CompilerParams(
            dimension_semantics=("parallel", "parallel"),
            vmem_limit_bytes=int(vmem_limit)),
        cost_estimate=cost,
    )(xh_p, xh_p, xle, xle, xlo, wcat, bias_tot)

    out = out_pad.reshape(b, hh_pad, wh, c_pad)[:, :hh, :, :c_high]
    out = out.astype(jnp.float32)
    return jnp.transpose(out, (0, 3, 1, 2))                  # back to NCHW


# ----------------------------- pure-JAX reference -----------------------------

def reference_forward(x_high, x_low, params, eps=1e-5):
    def bn(x, gamma, beta, mean, var):
        inv = 1.0 / jnp.sqrt(var + eps)
        return ((x - mean[None, :, None, None]) * inv[None, :, None, None]
                * gamma[None, :, None, None] + beta[None, :, None, None])

    gp = jnp.mean(x_low, axis=(2, 3), keepdims=True)          # (B, C_low, 1, 1)
    gp = lax.conv_general_dilated(gp, params["conv1x1_w"], (1, 1), "VALID")
    gp = bn(gp, *params["bn_low"])
    gp = jax.nn.relu(gp)

    m = lax.conv_general_dilated(x_high, params["conv3x3_w"], (1, 1),
                                 ((1, 1), (1, 1)))
    m = bn(m, *params["bn_high"])
    att = m * gp

    d = lax.conv_general_dilated(x_low, params["str_w"], (2, 2),
                                 ((1, 1), (1, 1)))
    d = bn(d, *params["bn_up"])
    return jax.nn.relu(d + att)


# ----------------------------- main -------------------------------------------

if __name__ == "__main__":
    key = jax.random.PRNGKey(0)
    keys = jax.random.split(key, 16)

    B = 2
    C_LOW = 4       # channels_low
    C_HIGH = 8      # channels_high
    H = W = 16      # x_low spatial
    HH = WH = 8     # x_high spatial (= H // 2, matches stride-2 conv output)

    x_low = jax.random.normal(keys[0], (B, C_LOW, H, W), jnp.float32)
    x_high = jax.random.normal(keys[1], (B, C_HIGH, HH, WH), jnp.float32)

    def bn_params(k, c):
        k1, k2, k3, k4 = jax.random.split(k, 4)
        gamma = jax.random.uniform(k1, (c,), jnp.float32, 0.5, 1.5)
        beta = 0.1 * jax.random.normal(k2, (c,), jnp.float32)
        mean = 0.1 * jax.random.normal(k3, (c,), jnp.float32)
        var = jax.random.uniform(k4, (c,), jnp.float32, 0.5, 1.5)
        return (gamma, beta, mean, var)

    params = {
        # conv weights in PyTorch OIHW layout (no bias, as in the module)
        "conv3x3_w": 0.1 * jax.random.normal(keys[2], (C_HIGH, C_HIGH, 3, 3), jnp.float32),
        "conv1x1_w": 0.1 * jax.random.normal(keys[3], (C_HIGH, C_LOW, 1, 1), jnp.float32),
        "str_w":     0.1 * jax.random.normal(keys[4], (C_HIGH, C_LOW, 3, 3), jnp.float32),
        # BatchNorm (gamma, beta, running_mean, running_var), inference mode
        "bn_low":  bn_params(keys[5], C_HIGH),
        "bn_high": bn_params(keys[6], C_HIGH),
        "bn_up":   bn_params(keys[7], C_HIGH),
    }

    out = render_trans_forward(x_high, x_low, params)
    out = jax.block_until_ready(out)

    ref = reference_forward(x_high, x_low, params)
    ref = jax.block_until_ready(ref)

    assert out.shape == (B, C_HIGH, HH, WH), out.shape
    # bf16 activations / weights / output (f32 accumulation) -> loose tolerance
    np.testing.assert_allclose(np.asarray(out), np.asarray(ref),
                               rtol=3e-2, atol=3e-2)
    print("KERNEL_OK")
</pallas_src>

<mosaic_0001>
module attributes {stable_mosaic.version = 11 : i64} {
  func.func @render_trans_kernel(%arg0: i32, %arg1: i32, %arg2: memref<1x8x10x8xbf16, #tpu.memory_space<vmem>>, %arg3: memref<1x2x10x8xbf16, #tpu.memory_space<vmem>>, %arg4: memref<1x8x9x8xbf16, #tpu.memory_space<vmem>>, %arg5: memref<1x1x9x8xbf16, #tpu.memory_space<vmem>>, %arg6: memref<1x8x9x8xbf16, #tpu.memory_space<vmem>>, %arg7: memref<1x108x128xbf16, #tpu.memory_space<vmem>>, %arg8: memref<1x1x128xf32, #tpu.memory_space<vmem>>, %arg9: memref<1x1x64x128xbf16, #tpu.memory_space<vmem>>, %arg10: memref<10x10x8xbf16, #tpu.memory_space<vmem>>, %arg11: memref<9x9x8xbf16, #tpu.memory_space<vmem>>, %arg12: memref<64x108xbf16, #tpu.memory_space<vmem>>) attributes {dimension_semantics = [#tpu.dimension_semantics<parallel>, #tpu.dimension_semantics<parallel>], iteration_bounds = array<i64: 2, 1>, scalar_prefetch = 0 : i64, scratch_operands = 3 : i64, tpu.core_type = #tpu.core_type<tc>, window_params = [{transform_indices = @transform_0, window_bounds = array<i64: 1, 8, 10, 8>}, {transform_indices = @transform_1, window_bounds = array<i64: 1, 2, 10, 8>}, {transform_indices = @transform_2, window_bounds = array<i64: 1, 8, 9, 8>}, {transform_indices = @transform_3, window_bounds = array<i64: 1, 1, 9, 8>}, {transform_indices = @transform_4, window_bounds = array<i64: 1, 8, 9, 8>}, {transform_indices = @transform_5, window_bounds = array<i64: 1, 108, 128>}, {transform_indices = @transform_6, window_bounds = array<i64: 1, 1, 128>}, {transform_indices = @transform_7, window_bounds = array<i64: 1, 1, 64, 128>}]} {
    %c0 = arith.constant 0 : index
    %c0_0 = arith.constant 0 : index
    %c0_1 = arith.constant 0 : index
    %c0_2 = arith.constant 0 : index
    %0 = vector.load %arg2[%c0, %c0_0, %c0_1, %c0_2] : memref<1x8x10x8xbf16, #tpu.memory_space<vmem>>, vector<1x8x10x8xbf16>
    %1 = vector.shape_cast %0 : vector<1x8x10x8xbf16> to vector<8x10x8xbf16>
    %c0_3 = arith.constant 0 : index
    %c0_4 = arith.constant 0 : index
    %c0_5 = arith.constant 0 : index
    %2 = vector.load %arg10[%c0_3, %c0_4, %c0_5] : memref<10x10x8xbf16, #tpu.memory_space<vmem>>, vector<8x10x8xbf16>
    tpu.vector_store %arg10[%c0_3, %c0_4, %c0_5], %1 {strides = array<i32>} : memref<10x10x8xbf16, #tpu.memory_space<vmem>>, vector<8x10x8xbf16>,
    %c0_6 = arith.constant 0 : index
    %c0_7 = arith.constant 0 : index
    %c0_8 = arith.constant 0 : index
    %c0_9 = arith.constant 0 : index
    %3 = vector.load %arg3[%c0_6, %c0_7, %c0_8, %c0_9] : memref<1x2x10x8xbf16, #tpu.memory_space<vmem>>, vector<1x2x10x8xbf16>
    %4 = vector.shape_cast %3 : vector<1x2x10x8xbf16> to vector<2x10x8xbf16>
    %c8 = arith.constant 8 : index
    %c0_10 = arith.constant 0 : index
    %c0_11 = arith.constant 0 : index
    %5 = vector.load %arg10[%c8, %c0_10, %c0_11] : memref<10x10x8xbf16, #tpu.memory_space<vmem>>, vector<2x10x8xbf16>
    tpu.vector_store %arg10[%c8, %c0_10, %c0_11], %4 {strides = array<i32>} : memref<10x10x8xbf16, #tpu.memory_space<vmem>>, vector<2x10x8xbf16>,
    %c0_12 = arith.constant 0 : index
    %c0_13 = arith.constant 0 : index
    %c0_14 = arith.constant 0 : index
    %c0_15 = arith.constant 0 : index
    %6 = vector.load %arg4[%c0_12, %c0_13, %c0_14, %c0_15] : memref<1x8x9x8xbf16, #tpu.memory_space<vmem>>, vector<1x8x9x8xbf16>
    %7 = vector.shape_cast %6 : vector<1x8x9x8xbf16> to vector<8x9x8xbf16>
    %c0_16 = arith.constant 0 : index
    %c0_17 = arith.constant 0 : index
    %c0_18 = arith.constant 0 : index
    %8 = vector.load %arg11[%c0_16, %c0_17, %c0_18] : memref<9x9x8xbf16, #tpu.memory_space<vmem>>, vector<8x9x8xbf16>
    tpu.vector_store %arg11[%c0_16, %c0_17, %c0_18], %7 {strides = array<i32>} : memref<9x9x8xbf16, #tpu.memory_space<vmem>>, vector<8x9x8xbf16>,
    %c0_19 = arith.constant 0 : index
    %c0_20 = arith.constant 0 : index
    %c0_21 = arith.constant 0 : index
    %c0_22 = arith.constant 0 : index
    %9 = vector.load %arg5[%c0_19, %c0_20, %c0_21, %c0_22] : memref<1x1x9x8xbf16, #tpu.memory_space<vmem>>, vector<1x1x9x8xbf16>
    %10 = vector.shape_cast %9 : vector<1x1x9x8xbf16> to vector<1x9x8xbf16>
    %c8_23 = arith.constant 8 : index
    %c0_24 = arith.constant 0 : index
    %c0_25 = arith.constant 0 : index
    %11 = vector.load %arg11[%c8_23, %c0_24, %c0_25] : memref<9x9x8xbf16, #tpu.memory_space<vmem>>, vector<1x9x8xbf16>
    tpu.vector_store %arg11[%c8_23, %c0_24, %c0_25], %10 {strides = array<i32>} : memref<9x9x8xbf16, #tpu.memory_space<vmem>>, vector<1x9x8xbf16>,
    %c0_26 = arith.constant 0 : index
    %c0_27 = arith.constant 0 : index
    %c0_28 = arith.constant 0 : index
    %12 = vector.load %arg10[%c0_26, %c0_27, %c0_28] : memref<10x10x8xbf16, #tpu.memory_space<vmem>>, vector<8x8x8xbf16>
    %13 = vector.shape_cast %12 : vector<8x8x8xbf16> to vector<64x8xbf16>
    %c0_29 = arith.constant 0 : index
    %c0_30 = arith.constant 0 : index
    %14 = vector.load %arg12[%c0_29, %c0_30] : memref<64x108xbf16, #tpu.memory_space<vmem>>, vector<64x8xbf16>
    tpu.vector_store %arg12[%c0_29, %c0_30], %13 {strides = array<i32>} : memref<64x108xbf16, #tpu.memory_space<vmem>>, vector<64x8xbf16>,
    %c0_31 = arith.constant 0 : index
    %c1 = arith.constant 1 : index
    %c0_32 = arith.constant 0 : index
    %15 = vector.load %arg10[%c0_31, %c1, %c0_32] : memref<10x10x8xbf16, #tpu.memory_space<vmem>>, vector<8x8x8xbf16>
    %16 = vector.shape_cast %15 : vector<8x8x8xbf16> to vector<64x8xbf16>
    %c0_33 = arith.constant 0 : index
    %c8_34 = arith.constant 8 : index
    %17 = vector.load %arg12[%c0_33, %c8_34] : memref<64x108xbf16, #tpu.memory_space<vmem>>, vector<64x8xbf16>
    tpu.vector_store %arg12[%c0_33, %c8_34], %16 {strides = array<i32>} : memref<64x108xbf16, #tpu.memory_space<vmem>>, vector<64x8xbf16>,
    %c0_35 = arith.constant 0 : index
    %c2 = arith.constant 2 : index
    %c0_36 = arith.constant 0 : index
    %18 = vector.load %arg10[%c0_35, %c2, %c0_36] : memref<10x10x8xbf16, #tpu.memory_space<vmem>>, vector<8x8x8xbf16>
    %19 = vector.shape_cast %18 : vector<8x8x8xbf16> to vector<64x8xbf16>
    %c0_37 = arith.constant 0 : index
    %c16 = arith.constant 16 : index
    %20 = vector.load %arg12[%c0_37, %c16] : memref<64x108xbf16, #tpu.memory_space<vmem>>, vector<64x8xbf16>
    tpu.vector_store %arg12[%c0_37, %c16], %19 {strides = array<i32>} : memref<64x108xbf16, #tpu.memory_space<vmem>>, vector<64x8xbf16>,
    %c1_38 = arith.constant 1 : index
    %c0_39 = arith.constant 0 : index
    %c0_40 = arith.constant 0 : index
    %21 = vector.load %arg10[%c1_38, %c0_39, %c0_40] : memref<10x10x8xbf16, #tpu.memory_space<vmem>>, vector<8x8x8xbf16>
    %22 = vector.shape_cast %21 : vector<8x8x8xbf16> to vector<64x8xbf16>
    %c0_41 = arith.constant 0 : index
    %c24 = arith.constant 24 : index
    %23 = vector.load %arg12[%c0_41, %c24] : memref<64x108xbf16, #tpu.memory_space<vmem>>, vector<64x8xbf16>
    tpu.vector_store %arg12[%c0_41, %c24], %22 {strides = array<i32>} : memref<64x108xbf16, #tpu.memory_space<vmem>>, vector<64x8xbf16>,
    %c1_42 = arith.constant 1 : index
    %c1_43 = arith.constant 1 : index
    %c0_44 = arith.constant 0 : index
    %24 = vector.load %arg10[%c1_42, %c1_43, %c0_44] : memref<10x10x8xbf16, #tpu.memory_space<vmem>>, vector<8x8x8xbf16>
    %25 = vector.shape_cast %24 : vector<8x8x8xbf16> to vector<64x8xbf16>
    %c0_45 = arith.constant 0 : index
    %c32 = arith.constant 32 : index
    %26 = vector.load %arg12[%c0_45, %c32] : memref<64x108xbf16, #tpu.memory_space<vmem>>, vector<64x8xbf16>
    tpu.vector_store %arg12[%c0_45, %c32], %25 {strides = array<i32>} : memref<64x108xbf16, #tpu.memory_space<vmem>>, vector<64x8xbf16>,
    %c1_46 = arith.constant 1 : index
    %c2_47 = arith.constant 2 : index
    %c0_48 = arith.constant 0 : index
    %27 = vector.load %arg10[%c1_46, %c2_47, %c0_48] : memref<10x10x8xbf16, #tpu.memory_space<vmem>>, vector<8x8x8xbf16>
    %28 = vector.shape_cast %27 : vector<8x8x8xbf16> to vector<64x8xbf16>
    %c0_49 = arith.constant 0 : index
    %c40 = arith.constant 40 : index
    %29 = vector.load %arg12[%c0_49, %c40] : memref<64x108xbf16, #tpu.memory_space<vmem>>, vector<64x8xbf16>
    tpu.vector_store %arg12[%c0_49, %c40], %28 {strides = array<i32>} : memref<64x108xbf16, #tpu.memory_space<vmem>>, vector<64x8xbf16>,
    %c2_50 = arith.constant 2 : index
    %c0_51 = arith.constant 0 : index
    %c0_52 = arith.constant 0 : index
    %30 = vector.load %arg10[%c2_50, %c0_51, %c0_52] : memref<10x10x8xbf16, #tpu.memory_space<vmem>>, vector<8x8x8xbf16>
    %31 = vector.shape_cast %30 : vector<8x8x8xbf16> to vector<64x8xbf16>
    %c0_53 = arith.constant 0 : index
    %c48 = arith.constant 48 : index
    %32 = vector.load %arg12[%c0_53, %c48] : memref<64x108xbf16, #tpu.memory_space<vmem>>, vector<64x8xbf16>
    tpu.vector_store %arg12[%c0_53, %c48], %31 {strides = array<i32>} : memref<64x108xbf16, #tpu.memory_space<vmem>>, vector<64x8xbf16>,
    %c2_54 = arith.constant 2 : index
    %c1_55 = arith.constant 1 : index
    %c0_56 = arith.constant 0 : index
    %33 = vector.load %arg10[%c2_54, %c1_55, %c0_56] : memref<10x10x8xbf16, #tpu.memory_space<vmem>>, vector<8x8x8xbf16>
    %34 = vector.shape_cast %33 : vector<8x8x8xbf16> to vector<64x8xbf16>
    %c0_57 = arith.constant 0 : index
    %c56 = arith.constant 56 : index
    %35 = vector.load %arg12[%c0_57, %c56] : memref<64x108xbf16, #tpu.memory_space<vmem>>, vector<64x8xbf16>
    tpu.vector_store %arg12[%c0_57, %c56], %34 {strides = array<i32>} : memref<64x108xbf16, #tpu.memory_space<vmem>>, vector<64x8xbf16>,
    %c2_58 = arith.constant 2 : index
    %c2_59 = arith.constant 2 : index
    %c0_60 = arith.constant 0 : index
    %36 = vector.load %arg10[%c2_58, %c2_59, %c0_60] : memref<10x10x8xbf16, #tpu.memory_space<vmem>>, vector<8x8x8xbf16>
    %37 = vector.shape_cast %36 : vector<8x8x8xbf16> to vector<64x8xbf16>
    %c0_61 = arith.constant 0 : index
    %c64 = arith.constant 64 : index
    %38 = vector.load %arg12[%c0_61, %c64] : memref<64x108xbf16, #tpu.memory_space<vmem>>, vector<64x8xbf16>
    tpu.vector_store %arg12[%c0_61, %c64], %37 {strides = array<i32>} : memref<64x108xbf16, #tpu.memory_space<vmem>>, vector<64x8xbf16>,
    %c0_62 = arith.constant 0 : index
    %c0_63 = arith.constant 0 : index
    %c0_64 = arith.constant 0 : index
    %39 = vector.load %arg11[%c0_62, %c0_63, %c0_64] : memref<9x9x8xbf16, #tpu.memory_space<vmem>>, vector<8x8x4xbf16>
    %40 = vector.shape_cast %39 : vector<8x8x4xbf16> to vector<64x4xbf16>
    %c0_65 = arith.constant 0 : index
    %c72 = arith.constant 72 : index
    %41 = vector.load %arg12[%c0_65, %c72] : memref<64x108xbf16, #tpu.memory_space<vmem>>, vector<64x4xbf16>
    tpu.vector_store %arg12[%c0_65, %c72], %40 {strides = array<i32>} : memref<64x108xbf16, #tpu.memory_space<vmem>>, vector<64x4xbf16>,
    %c0_66 = arith.constant 0 : index
    %c0_67 = arith.constant 0 : index
    %c4 = arith.constant 4 : index
    %42 = vector.load %arg11[%c0_66, %c0_67, %c4] : memref<9x9x8xbf16, #tpu.memory_space<vmem>>, vector<8x8x4xbf16>
    %43 = vector.shape_cast %42 : vector<8x8x4xbf16> to vector<64x4xbf16>
    %c0_68 = arith.constant 0 : index
    %c76 = arith.constant 76 : index
    %44 = vector.load %arg12[%c0_68, %c76] : memref<64x108xbf16, #tpu.memory_space<vmem>>, vector<64x4xbf16>
    tpu.vector_store %arg12[%c0_68, %c76], %43 {strides = array<i32>} : memref<64x108xbf16, #tpu.memory_space<vmem>>, vector<64x4xbf16>,
    %c0_69 = arith.constant 0 : index
    %c1_70 = arith.constant 1 : index
    %c0_71 = arith.constant 0 : index
    %45 = vector.load %arg11[%c0_69, %c1_70, %c0_71] : memref<9x9x8xbf16, #tpu.memory_space<vmem>>, vector<8x8x4xbf16>
    %46 = vector.shape_cast %45 : vector<8x8x4xbf16> to vector<64x4xbf16>
    %c0_72 = arith.constant 0 : index
    %c80 = arith.constant 80 : index
    %47 = vector.load %arg12[%c0_72, %c80] : memref<64x108xbf16, #tpu.memory_space<vmem>>, vector<64x4xbf16>
    tpu.vector_store %arg12[%c0_72, %c80], %46 {strides = array<i32>} : memref<64x108xbf16, #tpu.memory_space<vmem>>, vector<64x4xbf16>,
    %c0_73 = arith.constant 0 : index
    %c0_74 = arith.constant 0 : index
    %c0_75 = arith.constant 0 : index
    %c0_76 = arith.constant 0 : index
    %48 = vector.load %arg6[%c0_73, %c0_74, %c0_75, %c0_76] : memref<1x8x9x8xbf16, #tpu.memory_space<vmem>>, vector<1x8x8x4xbf16>
    %49 = vector.shape_cast %48 : vector<1x8x8x4xbf16> to vector<8x8x4xbf16>
    %50 = vector.shape_cast %49 : vector<8x8x4xbf16> to vector<64x4xbf16>
    %c0_77 = arith.constant 0 : index
    %c84 = arith.constant 84 : index
    %51 = vector.load %arg12[%c0_77, %c84] : memref<64x108xbf16, #tpu.memory_space<vmem>>, vector<64x4xbf16>
    tpu.vector_store %arg12[%c0_77, %c84], %50 {strides = array<i32>} : memref<64x108xbf16, #tpu.memory_space<vmem>>, vector<64x4xbf16>,
    %c0_78 = arith.constant 0 : index
    %c0_79 = arith.constant 0 : index
    %c0_80 = arith.constant 0 : index
    %c4_81 = arith.constant 4 : index
    %52 = vector.load %arg6[%c0_78, %c0_79, %c0_80, %c4_81] : memref<1x8x9x8xbf16, #tpu.memory_space<vmem>>, vector<1x8x8x4xbf16>
    %53 = vector.shape_cast %52 : vector<1x8x8x4xbf16> to vector<8x8x4xbf16>
    %54 = vector.shape_cast %53 : vector<8x8x4xbf16> to vector<64x4xbf16>
    %c0_82 = arith.constant 0 : index
    %c88 = arith.constant 88 : index
    %55 = vector.load %arg12[%c0_82, %c88] : memref<64x108xbf16, #tpu.memory_space<vmem>>, vector<64x4xbf16>
    tpu.vector_store %arg12[%c0_82, %c88], %54 {strides = array<i32>} : memref<64x108xbf16, #tpu.memory_space<vmem>>, vector<64x4xbf16>,
    %c0_83 = arith.constant 0 : index
    %c0_84 = arith.constant 0 : index
    %c1_85 = arith.constant 1 : index
    %c0_86 = arith.constant 0 : index
    %56 = vector.load %arg6[%c0_83, %c0_84, %c1_85, %c0_86] : memref<1x8x9x8xbf16, #tpu.memory_space<vmem>>, vector<1x8x8x4xbf16>
    %57 = vector.shape_cast %56 : vector<1x8x8x4xbf16> to vector<8x8x4xbf16>
    %58 = vector.shape_cast %57 : vector<8x8x4xbf16> to vector<64x4xbf16>
    %c0_87 = arith.constant 0 : index
    %c92 = arith.constant 92 : index
    %59 = vector.load %arg12[%c0_87, %c92] : memref<64x108xbf16, #tpu.memory_space<vmem>>, vector<64x4xbf16>
    tpu.vector_store %arg12[%c0_87, %c92], %58 {strides = array<i32>} : memref<64x108xbf16, #tpu.memory_space<vmem>>, vector<64x4xbf16>,
    %c1_88 = arith.constant 1 : index
    %c0_89 = arith.constant 0 : index
    %c0_90 = arith.constant 0 : index
    %60 = vector.load %arg11[%c1_88, %c0_89, %c0_90] : memref<9x9x8xbf16, #tpu.memory_space<vmem>>, vector<8x8x4xbf16>
    %61 = vector.shape_cast %60 : vector<8x8x4xbf16> to vector<64x4xbf16>
    %c0_91 = arith.constant 0 : index
    %c96 = arith.constant 96 : index
    %62 = vector.load %arg12[%c0_91, %c96] : memref<64x108xbf16, #tpu.memory_space<vmem>>, vector<64x4xbf16>
    tpu.vector_store %arg12[%c0_91, %c96], %61 {strides = array<i32>} : memref<64x108xbf16, #tpu.memory_space<vmem>>, vector<64x4xbf16>,
    %c1_92 = arith.constant 1 : index
    %c0_93 = arith.constant 0 : index
    %c4_94 = arith.constant 4 : index
    %63 = vector.load %arg11[%c1_92, %c0_93, %c4_94] : memref<9x9x8xbf16, #tpu.memory_space<vmem>>, vector<8x8x4xbf16>
    %64 = vector.shape_cast %63 : vector<8x8x4xbf16> to vector<64x4xbf16>
    %c0_95 = arith.constant 0 : index
    %c100 = arith.constant 100 : index
    %65 = vector.load %arg12[%c0_95, %c100] : memref<64x108xbf16, #tpu.memory_space<vmem>>, vector<64x4xbf16>
    tpu.vector_store %arg12[%c0_95, %c100], %64 {strides = array<i32>} : memref<64x108xbf16, #tpu.memory_space<vmem>>, vector<64x4xbf16>,
    %c1_96 = arith.constant 1 : index
    %c1_97 = arith.constant 1 : index
    %c0_98 = arith.constant 0 : index
    %66 = vector.load %arg11[%c1_96, %c1_97, %c0_98] : memref<9x9x8xbf16, #tpu.memory_space<vmem>>, vector<8x8x4xbf16>
    %67 = vector.shape_cast %66 : vector<8x8x4xbf16> to vector<64x4xbf16>
    %c0_99 = arith.constant 0 : index
    %c104 = arith.constant 104 : index
    %68 = vector.load %arg12[%c0_99, %c104] : memref<64x108xbf16, #tpu.memory_space<vmem>>, vector<64x4xbf16>
    tpu.vector_store %arg12[%c0_99, %c104], %67 {strides = array<i32>} : memref<64x108xbf16, #tpu.memory_space<vmem>>, vector<64x4xbf16>,
    %c0_100 = arith.constant 0 : index
    %c0_101 = arith.constant 0 : index
    %69 = vector.load %arg12[%c0_100, %c0_101] : memref<64x108xbf16, #tpu.memory_space<vmem>>, vector<64x108xbf16>
    %c0_102 = arith.constant 0 : index
    %c0_103 = arith.constant 0 : index
    %c0_104 = arith.constant 0 : index
    %70 = vector.load %arg7[%c0_102, %c0_103, %c0_104] : memref<1x108x128xbf16, #tpu.memory_space<vmem>>, vector<1x108x128xbf16>
    %71 = vector.shape_cast %70 : vector<1x108x128xbf16> to vector<108x128xbf16>
    %cst = arith.constant dense<0.000000e+00> : vector<64x128xf32>
    %72 = tpu.matmul %69, %71, %cst {dimension_numbers = #tpu.dot_dimension_numbers<[1], [0], [0], [1], [0, 0, 1, 1], [], []>} : vector<64x108xbf16>, vector<108x128xbf16>, vector<64x128xf32> -> vector<64x128xf32>
    %c0_105 = arith.constant 0 : index
    %c0_106 = arith.constant 0 : index
    %c0_107 = arith.constant 0 : index
    %73 = vector.load %arg8[%c0_105, %c0_106, %c0_107] : memref<1x1x128xf32, #tpu.memory_space<vmem>>, vector<1x1x128xf32>
    %74 = vector.shape_cast %73 : vector<1x1x128xf32> to vector<1x128xf32>
    %75 = vector.broadcast %74 : vector<1x128xf32> to vector<64x128xf32>
    %76 = arith.addf %72, %75 : vector<64x128xf32>
    %cst_108 = arith.constant 0.000000e+00 : f32
    %77 = vector.broadcast %cst_108 : f32 to vector<64x128xf32>
    %78 = arith.maximumf %76, %77 : vector<64x128xf32>
    %79 = arith.truncf %78 : vector<64x128xf32> to vector<64x128xbf16>
    %c0_109 = arith.constant 0 : index
    %c0_110 = arith.constant 0 : index
    %c0_111 = arith.constant 0 : index
    %c0_112 = arith.constant 0 : index
    %80 = vector.load %arg9[%c0_109, %c0_110, %c0_111, %c0_112] : memref<1x1x64x128xbf16, #tpu.memory_space<vmem>>, vector<1x1x64x128xbf16>
    %81 = vector.shape_cast %80 : vector<1x1x64x128xbf16> to vector<64x128xbf16>
    %82 = vector.shape_cast %79 : vector<64x128xbf16> to vector<1x1x64x128xbf16>
    tpu.vector_store %arg9[%c0_109, %c0_110, %c0_111, %c0_112], %82 {strides = array<i32>} : memref<1x1x64x128xbf16, #tpu.memory_space<vmem>>, vector<1x1x64x128xbf16>,
    return
  }
  func.func @transform_0(%arg0: i32, %arg1: i32) -> (i32, i32, i32, i32) {
    %c0_i32 = arith.constant 0 : i32
    %c0_i32_0 = arith.constant 0 : i32
    %c0_i32_1 = arith.constant 0 : i32
    return %arg0, %arg1, %c0_i32, %c0_i32_0 : i32, i32, i32, i32
  }
  func.func @transform_1(%arg0: i32, %arg1: i32) -> (i32, i32, i32, i32) {
    %c1_i32 = arith.constant 1 : i32
    %0 = arith.addi %arg1, %c1_i32 : i32
    %c4_i32 = arith.constant 4 : i32
    %1 = arith.muli %0, %c4_i32 : i32
    %c0_i32 = arith.constant 0 : i32
    %c0_i32_0 = arith.constant 0 : i32
    %c0_i32_1 = arith.constant 0 : i32
    return %arg0, %1, %c0_i32, %c0_i32_0 : i32, i32, i32, i32
  }
  func.func @transform_2(%arg0: i32, %arg1: i32) -> (i32, i32, i32, i32) {
    %c0_i32 = arith.constant 0 : i32
    %c0_i32_0 = arith.constant 0 : i32
    %c0_i32_1 = arith.constant 0 : i32
    return %arg0, %arg1, %c0_i32, %c0_i32_0 : i32, i32, i32, i32
  }
  func.func @transform_3(%arg0: i32, %arg1: i32) -> (i32, i32, i32, i32) {
    %c1_i32 = arith.constant 1 : i32
    %0 = arith.addi %arg1, %c1_i32 : i32
    %c8_i32 = arith.constant 8 : i32
    %1 = arith.muli %0, %c8_i32 : i32
    %c0_i32 = arith.constant 0 : i32
    %c0_i32_0 = arith.constant 0 : i32
    %c0_i32_1 = arith.constant 0 : i32
    return %arg0, %1, %c0_i32, %c0_i32_0 : i32, i32, i32, i32
  }
  func.func @transform_4(%arg0: i32, %arg1: i32) -> (i32, i32, i32, i32) {
    %c0_i32 = arith.constant 0 : i32
    %c0_i32_0 = arith.constant 0 : i32
    %c0_i32_1 = arith.constant 0 : i32
    return %arg0, %arg1, %c0_i32, %c0_i32_0 : i32, i32, i32, i32
  }
  func.func @transform_5(%arg0: i32, %arg1: i32) -> (i32, i32, i32) {
    %c0_i32 = arith.constant 0 : i32
    %c0_i32_0 = arith.constant 0 : i32
    %c0_i32_1 = arith.constant 0 : i32
    return %arg0, %c0_i32, %c0_i32_0 : i32, i32, i32
  }
  func.func @transform_6(%arg0: i32, %arg1: i32) -> (i32, i32, i32) {
    %c0_i32 = arith.constant 0 : i32
    %c0_i32_0 = arith.constant 0 : i32
    %c0_i32_1 = arith.constant 0 : i32
    return %arg0, %c0_i32, %c0_i32_0 : i32, i32, i32
  }
  func.func @transform_7(%arg0: i32, %arg1: i32) -> (i32, i32, i32, i32) {
    %c0_i32 = arith.constant 0 : i32
    %c0_i32_0 = arith.constant 0 : i32
    %c0_i32_1 = arith.constant 0 : i32
    return %arg0, %arg1, %c0_i32, %c0_i32_0 : i32, i32, i32, i32
  }
}

</mosaic_0001>

<llo_original>
// kernel: render_trans_forward.1
$region0: #{render_trans_forward.1}
  #allocation0 [shape = 'u32[]', space=smem, size = 0x4, offset = 0x4, fixed_abs, tag = 'smem constant byte address 0x4 - core index']
  #allocation1 [shape = 'u32[144,128]{1,0:T(1,128)}', space=vmem, size = 0x12000, scoped, tag = 'internal scratch']
  #allocation2 [shape = 'bf16[10,10,8]{2,1,0:T(8,128)(2,1)}', space=vmem, size = 0xa000, scoped, tag = 'scratch operand']
  #allocation3 [shape = 'bf16[9,9,8]{2,1,0:T(8,128)(2,1)}', space=vmem, size = 0x9000, scoped, tag = 'scratch operand']
  #allocation4 [shape = 'bf16[64,108]{1,0:T(16,128)(2,1)}', space=vmem, size = 0x4000, scoped, tag = 'scratch operand']
  %s0 = inlined_call_operand.vmem [shape: bf16[2,10,10,8], index: 0, kind: input, shape index: {}, may-alias: {0,1}]
  %s1 = inlined_call_operand.vmem [shape: bf16[2,10,10,8], index: 1, kind: input, shape index: {}, may-alias: {0,1}]
  %s2 = inlined_call_operand.vmem [shape: bf16[2,9,9,8], index: 2, kind: input, shape index: {}, may-alias: {2,3}]
  %s3 = inlined_call_operand.vmem [shape: bf16[2,9,9,8], index: 3, kind: input, shape index: {}, may-alias: {2,3}]
  %s4 = inlined_call_operand.vmem [shape: bf16[2,9,9,8], index: 4, kind: input, shape index: {}]
  %s5 = inlined_call_operand.vmem [shape: bf16[2,108,128], index: 5, kind: input, shape index: {}]
  %s6 = inlined_call_operand.vmem [shape: f32[2,1,128], index: 6, kind: input, shape index: {}]
  %s7 = inlined_call_operand.vmem [shape: bf16[2,1,64,128], index: 7, kind: output, shape index: {}]
  %s8 = sld [smem:[#allocation0]]
  $region61: #{render_trans_forward.1} parent=0
    _
  %s10 = ssub.s32 1, %s8
  %s11 = scalar_select 0, %s10, %s8
  loop: start=0, step=1, limit=4
  $region2: #{render_trans_forward.1} parent=0 // loop_pre_header
    _
  $region3: #{render_trans_forward.1} parent=0 // loop_header
    %s13 = sphi 0, %s17
    %p14 = scmp.ge.s32.totalorder %s13, 4
    %s20 = sphi 0, %s32
    %s21 = sphi 0, %s28
    %s22 = sphi 0, %s20
    %s23 = sphi 0, %s21
    %s24 = sphi 0, %s22
    %s25 = sphi 0, %s23
    %s37 = sphi 0, %s39
    %s40 = sphi 0, %s37
    %s41 = sphi 0, %s40
    %s57 = sphi 0, %s41
    %s69 = sphi 0, %s71
    %s72 = sphi 0, %s69
    %s73 = sphi 0, %s72
    %s89 = sphi 0, %s73
    %s97 = sphi 0, %s99
    %s100 = sphi 0, %s97
    %s101 = sphi 0, %s100
    %s117 = sphi 0, %s101
    %s129 = sphi 0, %s131
    %s132 = sphi 0, %s129
    %s133 = sphi 0, %s132
    %s149 = sphi 0, %s133
    %s157 = sphi 0, %s159
    %s160 = sphi 0, %s157
    %s161 = sphi 0, %s160
    %s177 = sphi 0, %s161
    %s183 = sphi 0, %s185
    %s186 = sphi 0, %s183
    %s187 = sphi 0, %s186
    %s203 = sphi 0, %s187
    %s209 = sphi 0, %s211
    %s212 = sphi 0, %s209
    %s213 = sphi 0, %s212
    %s229 = sphi 0, %s213
    %s237 = sphi 0, %s239
    %s240 = sphi 0, %s237
    %s241 = sphi 0, %s240
    %s257 = sphi 0, %s241
  $region4: #{render_trans_forward.1} parent=0 // loop_header_branch
    %16 = sbr.rel (%p14) target = $region8
  $region5: #{render_trans_forward.1} parent=0 // loop_body
    %s18 = ssub.s32 %s13, 1
    %s19 = ssub.s32 %s13, 2
    %s26 = sadd.s32 1, %s21
    %p27 = scmp.ge.s32.totalorder %s26, 1
    %s28 = scalar_select %p27, 0, %s26
    %s29 = sadd.s32 1, %s20
    %s30 = scalar_select %p27, %s29, %s20
    %p31 = scmp.ge.s32.totalorder %s30, 2
    %s32 = scalar_select %p31, 0, %s30
    %s33 = ssub.s32 %s20, %s32
    %s34 = ssub.s32 %s21, %s28
    %s35 = sor.u32 %s33, %s34
    %p36 = scmp.eq.s32.totalorder %s35, 0
    %s38 = sadd.s32 %s37, 1
    %s39 = scalar_select %p36, %s37, %s38
    %p42 = pneg %p36
    %p43 = scmp.eq.s32.totalorder %s13, 1
    %p44 = por %p42, %p43
    %p45 = scmp.ne.s32.totalorder %s37, %s40
    %p46 = scmp.eq.s32.totalorder %s13, 0
    %p47 = por %p45, %p46
    %p48 = scmp.ne.s32.totalorder %s37, %s40
    %p49 = scmp.eq.s32.totalorder %s18, 1
    %p50 = por %p48, %p49
    %p51 = scmp.ne.s32.totalorder %s40, %s41
    %p52 = scmp.eq.s32.totalorder %s18, 0
    %p53 = por %p51, %p52
    %p54 = scmp.ne.s32.totalorder %s40, %s41
    %p55 = scmp.eq.s32.totalorder %s19, 1
    %p56 = por %p54, %p55
    %p58 = scmp.ne.s32.totalorder %s41, %s57
    %p59 = scmp.eq.s32.totalorder %s19, 0
    %p60 = por %p58, %p59
    %s61 = sadd.s32 %s21, 1
    %s62 = smul.u32 %s61, 4
    %s63 = sadd.s32 %s28, 1
    %s64 = smul.u32 %s63, 4
    %s65 = ssub.s32 %s20, %s32
    %s66 = ssub.s32 %s62, %s64
    %s67 = sor.u32 %s65, %s66
    %p68 = scmp.eq.s32.totalorder %s67, 0
    %s70 = sadd.s32 %s69, 1
    %s71 = scalar_select %p68, %s69, %s70
    %p74 = pneg %p68
    %p75 = scmp.eq.s32.totalorder %s13, 1
    %p76 = por %p74, %p75
    %p77 = scmp.ne.s32.totalorder %s69, %s72
    %p78 = scmp.eq.s32.totalorder %s13, 0
    %p79 = por %p77, %p78
    %p80 = scmp.ne.s32.totalorder %s69, %s72
    %p81 = scmp.eq.s32.totalorder %s18, 1
    %p82 = por %p80, %p81
    %p83 = scmp.ne.s32.totalorder %s72, %s73
    %p84 = scmp.eq.s32.totalorder %s18, 0
    %p85 = por %p83, %p84
    %p86 = scmp.ne.s32.totalorder %s72, %s73
    %p87 = scmp.eq.s32.totalorder %s19, 1
    %p88 = por %p86, %p87
    %p90 = scmp.ne.s32.totalorder %s73, %s89
    %p91 = scmp.eq.s32.totalorder %s19, 0
    %p92 = por %p90, %p91
    %s93 = ssub.s32 %s20, %s32
    %s94 = ssub.s32 %s21, %s28
    %s95 = sor.u32 %s93, %s94
    %p96 = scmp.eq.s32.totalorder %s95, 0
    %s98 = sadd.s32 %s97, 1
    %s99 = scalar_select %p96, %s97, %s98
    %p102 = pneg %p96
    %p103 = scmp.eq.s32.totalorder %s13, 1
    %p104 = por %p102, %p103
    %p105 = scmp.ne.s32.totalorder %s97, %s100
    %p106 = scmp.eq.s32.totalorder %s13, 0
    %p107 = por %p105, %p106
    %p108 = scmp.ne.s32.totalorder %s97, %s100
    %p109 = scmp.eq.s32.totalorder %s18, 1
    %p110 = por %p108, %p109
    %p111 = scmp.ne.s32.totalorder %s100, %s101
    %p112 = scmp.eq.s32.totalorder %s18, 0
    %p113 = por %p111, %p112
    %p114 = scmp.ne.s32.totalorder %s100, %s101
    %p115 = scmp.eq.s32.totalorder %s19, 1
    %p116 = por %p114, %p115
    %p118 = scmp.ne.s32.totalorder %s101, %s117
    %p119 = scmp.eq.s32.totalorder %s19, 0
    %p120 = por %p118, %p119
    %s121 = sadd.s32 %s21, 1
    %s122 = smul.u32 %s121, 8
    %s123 = sadd.s32 %s28, 1
    %s124 = smul.u32 %s123, 8
    %s125 = ssub.s32 %s20, %s32
    %s126 = ssub.s32 %s122, %s124
    %s127 = sor.u32 %s125, %s126
    %p128 = scmp.eq.s32.totalorder %s127, 0
    %s130 = sadd.s32 %s129, 1
    %s131 = scalar_select %p128, %s129, %s130
    %p134 = pneg %p128
    %p135 = scmp.eq.s32.totalorder %s13, 1
    %p136 = por %p134, %p135
    %p137 = scmp.ne.s32.totalorder %s129, %s132
    %p138 = scmp.eq.s32.totalorder %s13, 0
    %p139 = por %p137, %p138
    %p140 = scmp.ne.s32.totalorder %s129, %s132
    %p141 = scmp.eq.s32.totalorder %s18, 1
    %p142 = por %p140, %p141
    %p143 = scmp.ne.s32.totalorder %s132, %s133
    %p144 = scmp.eq.s32.totalorder %s18, 0
    %p145 = por %p143, %p144
    %p146 = scmp.ne.s32.totalorder %s132, %s133
    %p147 = scmp.eq.s32.totalorder %s19, 1
    %p148 = por %p146, %p147
    %p150 = scmp.ne.s32.totalorder %s133, %s149
    %p151 = scmp.eq.s32.totalorder %s19, 0
    %p152 = por %p150, %p151
    %s153 = ssub.s32 %s20, %s32
    %s154 = ssub.s32 %s21, %s28
    %s155 = sor.u32 %s153, %s154
    %p156 = scmp.eq.s32.totalorder %s155, 0
    %s158 = sadd.s32 %s157, 1
    %s159 = scalar_select %p156, %s157, %s158
    %p162 = pneg %p156
    %p163 = scmp.eq.s32.totalorder %s13, 1
    %p164 = por %p162, %p163
    %p165 = scmp.ne.s32.totalorder %s157, %s160
    %p166 = scmp.eq.s32.totalorder %s13, 0
    %p167 = por %p165, %p166
    %p168 = scmp.ne.s32.totalorder %s157, %s160
    %p169 = scmp.eq.s32.totalorder %s18, 1
    %p170 = por %p168, %p169
    %p171 = scmp.ne.s32.totalorder %s160, %s161
    %p172 = scmp.eq.s32.totalorder %s18, 0
    %p173 = por %p171, %p172
    %p174 = scmp.ne.s32.totalorder %s160, %s161
    %p175 = scmp.eq.s32.totalorder %s19, 1
    %p176 = por %p174, %p175
    %p178 = scmp.ne.s32.totalorder %s161, %s177
    %p179 = scmp.eq.s32.totalorder %s19, 0
    %p180 = por %p178, %p179
    %s181 = ssub.s32 %s20, %s32
    %p182 = scmp.eq.s32.totalorder %s181, 0
    %s184 = sadd.s32 %s183, 1
    %s185 = scalar_select %p182, %s183, %s184
    %p188 = pneg %p182
    %p189 = scmp.eq.s32.totalorder %s13, 1
    %p190 = por %p188, %p189
    %p191 = scmp.ne.s32.totalorder %s183, %s186
    %p192 = scmp.eq.s32.totalorder %s13, 0
    %p193 = por %p191, %p192
    %p194 = scmp.ne.s32.totalorder %s183, %s186
    %p195 = scmp.eq.s32.totalorder %s18, 1
    %p196 = por %p194, %p195
    %p197 = scmp.ne.s32.totalorder %s186, %s187
    %p198 = scmp.eq.s32.totalorder %s18, 0
    %p199 = por %p197, %p198
    %p200 = scmp.ne.s32.totalorder %s186, %s187
    %p201 = scmp.eq.s32.totalorder %s19, 1
    %p202 = por %p200, %p201
    %p204 = scmp.ne.s32.totalorder %s187, %s203
    %p205 = scmp.eq.s32.totalorder %s19, 0
    %p206 = por %p204, %p205
    %s207 = ssub.s32 %s20, %s32
    %p208 = scmp.eq.s32.totalorder %s207, 0
    %s210 = sadd.s32 %s209, 1
    %s211 = scalar_select %p208, %s209, %s210
    %p214 = pneg %p208
    %p215 = scmp.eq.s32.totalorder %s13, 1
    %p216 = por %p214, %p215
    %p217 = scmp.ne.s32.totalorder %s209, %s212
    %p218 = scmp.eq.s32.totalorder %s13, 0
    %p219 = por %p217, %p218
    %p220 = scmp.ne.s32.totalorder %s209, %s212
    %p221 = scmp.eq.s32.totalorder %s18, 1
    %p222 = por %p220, %p221
    %p223 = scmp.ne.s32.totalorder %s212, %s213
    %p224 = scmp.eq.s32.totalorder %s18, 0
    %p225 = por %p223, %p224
    %p226 = scmp.ne.s32.totalorder %s212, %s213
    %p227 = scmp.eq.s32.totalorder %s19, 1
    %p228 = por %p226, %p227
    %p230 = scmp.ne.s32.totalorder %s213, %s229
    %p231 = scmp.eq.s32.totalorder %s19, 0
    %p232 = por %p230, %p231
    %s233 = ssub.s32 %s20, %s32
    %s234 = ssub.s32 %s21, %s28
    %s235 = sor.u32 %s233, %s234
    %p236 = scmp.eq.s32.totalorder %s235, 0
    %s238 = sadd.s32 %s237, 1
    %s239 = scalar_select %p236, %s237, %s238
    %p242 = pneg %p236
    %p243 = scmp.eq.s32.totalorder %s13, 1
    %p244 = por %p242, %p243
    %p245 = scmp.ne.s32.totalorder %s237, %s240
    %p246 = scmp.eq.s32.totalorder %s13, 0
    %p247 = por %p245, %p246
    %p248 = scmp.ne.s32.totalorder %s237, %s240
    %p249 = scmp.eq.s32.totalorder %s18, 1
    %p250 = por %p248, %p249
    %p251 = scmp.ne.s32.totalorder %s240, %s241
    %p252 = scmp.eq.s32.totalorder %s18, 0
    %p253 = por %p251, %p252
    %p254 = scmp.ne.s32.totalorder %s240, %s241
    %p255 = scmp.eq.s32.totalorder %s19, 1
    %p256 = por %p254, %p255
    %p258 = scmp.ne.s32.totalorder %s241, %s257
    %p259 = scmp.eq.s32.totalorder %s19, 0
    %p260 = por %p258, %p259
    %p261 = scmp.le.s32.totalorder 1, %s13
    %p262 = scmp.lt.s32.totalorder %s13, 3
    %p263 = pnand %p261, %p262
    %p264 = pneg %p263
    // Predicated region
    $region9: #{render_trans_forward.1} parent=5 // pred_check
      _
    $region10: #{render_trans_forward.1} parent=5 // pred_check_branch
      %266 = sbr.rel (%p263) target = $region12
    $region11: #{render_trans_forward.1} parent=5 // pred_region
      %s267 = ssub.s32 %s13, 1
    $region12: #{render_trans_forward.1} parent=5 // pred_fallthru
      _
    %p268 = scmp.lt.s32.totalorder %s13, 2
    // Predicated region
    $region13: #{render_trans_forward.1} parent=5 // pred_check
      %p269 = pneg %p268
    $region14: #{render_trans_forward.1} parent=5 // pred_check_branch
      %271 = sbr.rel (%p269) target = $region16
    $region15: #{render_trans_forward.1} parent=5 // pred_region
      // Predicated region
      $region17: #{render_trans_forward.1} parent=15 // pred_check
        %p272 = pneg %p47
      $region18: #{render_trans_forward.1} parent=15 // pred_check_branch
        %274 = sbr.rel (%p272) target = $region20
      $region19: #{render_trans_forward.1} parent=15 // pred_region
        %s275 = smul.u32 8, %s21
        %s276 = ssub.s32 10, %s275
        %p277 = scmp.lt.s32.totalorder %s276, 8
        %s278 = scalar_select %p277, %s276, 8
        %s279 = smul.u32 64, %s278
        %s280 = smul.u32 %s279, 2
        %p281 = scmp.lt.s32.totalorder %s20, 1
        %s282 = scalar_select %p281, %s20, 1
        %p283 = scmp.lt.s32.totalorder %s275, 9
        %s284 = scalar_select %p283, %s275, 9
        %s285 = smul.addr %s284, 2
        %s286 = smul.addr %s282, 20
        %s287 = sadd.s32 %s285, %s286
        %s288 = smul.addr %s287, 4
        %s289 = scalar_lea.vmem %s0, %s288
        %s290 = smul.u32 8, %s21
        %s291 = ssub.s32 10, %s290
        %p292 = scmp.lt.s32.totalorder %s291, 8
        %s293 = scalar_select %p292, %s291, 8
        %s294 = smul.u32 64, %s293
        %s295 = smul.u32 %s294, 2
      $region20: #{render_trans_forward.1} parent=15 // pred_fallthru
        _
      // Predicated region
      $region21: #{render_trans_forward.1} parent=15 // pred_check
        %p296 = pneg %p79
      $region22: #{render_trans_forward.1} parent=15 // pred_check_branch
        %298 = sbr.rel (%p296) target = $region24
      $region23: #{render_trans_forward.1} parent=15 // pred_region
        %s299 = sadd.s32 %s21, 1
        %s300 = smul.u32 %s299, 4
        %s301 = smul.u32 2, %s300
        %p302 = scmp.lt.s32.totalorder %s20, 1
        %s303 = scalar_select %p302, %s20, 1
        %p304 = scmp.lt.s32.totalorder %s301, 9
        %s305 = scalar_select %p304, %s301, 9
        %s306 = smul.addr %s305, 2
        %s307 = smul.addr %s303, 20
        %s308 = sadd.s32 %s306, %s307
        %s309 = smul.addr %s308, 4
        %s310 = scalar_lea.vmem %s1, %s309
        %s311 = sadd.s32 %s21, 1
        %s312 = smul.u32 %s311, 4
        %s313 = smul.u32 2, %s312
      $region24: #{render_trans_forward.1} parent=15 // pred_fallthru
        _
      // Predicated region
      $region25: #{render_trans_forward.1} parent=15 // pred_check
        %p314 = pneg %p107
      $region26: #{render_trans_forward.1} parent=15 // pred_check_branch
        %316 = sbr.rel (%p314) target = $region28
      $region27: #{render_trans_forward.1} parent=15 // pred_region
        %s317 = smul.u32 8, %s21
        %s318 = ssub.s32 9, %s317
        %p319 = scmp.lt.s32.totalorder %s318, 8
        %s320 = scalar_select %p319, %s318, 8
        %s321 = smul.u32 64, %s320
        %s322 = smul.u32 %s321, 2
        %p323 = scmp.lt.s32.totalorder %s20, 1
        %s324 = scalar_select %p323, %s20, 1
        %p325 = scmp.lt.s32.totalorder %s317, 8
        %s326 = scalar_select %p325, %s317, 8
        %s327 = smul.addr %s326, 2
        %s328 = smul.addr %s324, 18
        %s329 = sadd.s32 %s327, %s328
        %s330 = smul.addr %s329, 4
        %s331 = scalar_lea.vmem %s2, %s330
        %s332 = smul.u32 8, %s21
        %s333 = ssub.s32 9, %s332
        %p334 = scmp.lt.s32.totalorder %s333, 8
        %s335 = scalar_select %p334, %s333, 8
        %s336 = smul.u32 64, %s335
        %s337 = smul.u32 %s336, 2
      $region28: #{render_trans_forward.1} parent=15 // pred_fallthru
        _
      // Predicated region
      $region29: #{render_trans_forward.1} parent=15 // pred_check
        %p338 = pneg %p139
      $region30: #{render_trans_forward.1} parent=15 // pred_check_branch
        %340 = sbr.rel (%p338) target = $region32
      $region31: #{render_trans_forward.1} parent=15 // pred_region
        %s341 = sadd.s32 %s21, 1
        %s342 = smul.u32 %s341, 8
        %p343 = scmp.lt.s32.totalorder %s20, 1
        %s344 = scalar_select %p343, %s20, 1
        %p345 = scmp.lt.s32.totalorder %s342, 8
        %s346 = scalar_select %p345, %s342, 8
        %s347 = smul.addr %s346, 2
        %s348 = smul.addr %s344, 18
        %s349 = sadd.s32 %s347, %s348
        %s350 = smul.addr %s349, 4
        %s351 = scalar_lea.vmem %s3, %s350
        %s352 = sadd.s32 %s21, 1
        %s353 = smul.u32 %s352, 8
      $region32: #{render_trans_forward.1} parent=15 // pred_fallthru
        _
      // Predicated region
      $region33: #{render_trans_forward.1} parent=15 // pred_check
        %p354 = pneg %p167
      $region34: #{render_trans_forward.1} parent=15 // pred_check_branch
        %356 = sbr.rel (%p354) target = $region36
      $region35: #{render_trans_forward.1} parent=15 // pred_region
        %s357 = smul.u32 8, %s21
        %s358 = ssub.s32 9, %s357
        %p359 = scmp.lt.s32.totalorder %s358, 8
        %s360 = scalar_select %p359, %s358, 8
        %s361 = smul.u32 64, %s360
        %s362 = smul.u32 %s361, 2
        %p363 = scmp.lt.s32.totalorder %s20, 1
        %s364 = scalar_select %p363, %s20, 1
        %p365 = scmp.lt.s32.totalorder %s357, 8
        %s366 = scalar_select %p365, %s357, 8
        %s367 = smul.addr %s366, 2
        %s368 = smul.addr %s364, 18
        %s369 = sadd.s32 %s367, %s368
        %s370 = smul.addr %s369, 4
        %s371 = scalar_lea.vmem %s4, %s370
        %s372 = smul.u32 8, %s21
        %s373 = ssub.s32 9, %s372
        %p374 = scmp.lt.s32.totalorder %s373, 8
        %s375 = scalar_select %p374, %s373, 8
        %s376 = smul.u32 64, %s375
        %s377 = smul.u32 %s376, 2
      $region36: #{render_trans_forward.1} parent=15 // pred_fallthru
        _
      // Predicated region
      $region37: #{render_trans_forward.1} parent=15 // pred_check
        %p378 = pneg %p193
      $region38: #{render_trans_forward.1} parent=15 // pred_check_branch
        %380 = sbr.rel (%p378) target = $region40
      $region39: #{render_trans_forward.1} parent=15 // pred_region
        %p381 = scmp.lt.s32.totalorder %s20, 1
        %s382 = scalar_select %p381, %s20, 1
        %s383 = smul.addr %s382, 14
        %s384 = smul.addr %s383, 4
        %s385 = scalar_lea.vmem %s5, %s384
      $region40: #{render_trans_forward.1} parent=15 // pred_fallthru
        _
      // Predicated region
      $region41: #{render_trans_forward.1} parent=15 // pred_check
        %p386 = pneg %p219
      $region42: #{render_trans_forward.1} parent=15 // pred_check_branch
        %388 = sbr.rel (%p386) target = $region44
      $region43: #{render_trans_forward.1} parent=15 // pred_region
        %p389 = scmp.lt.s32.totalorder %s20, 1
        %s390 = scalar_select %p389, %s20, 1
        %s391 = scalar_lea.vmem %s6, %s390
      $region44: #{render_trans_forward.1} parent=15 // pred_fallthru
        _
    $region16: #{render_trans_forward.1} parent=5 // pred_fallthru
      _
    %p392 = scmp.le.s32.totalorder 1, %s13
    %p393 = scmp.lt.s32.totalorder %s13, 3
    %p394 = pnand %p392, %p393
    %p395 = pneg %p394
    // Predicated region
    $region45: #{render_trans_forward.1} parent=5 // pred_check
      _
    $region46: #{render_trans_forward.1} parent=5 // pred_check_branch
      %397 = sbr.rel (%p394) target = $region48
    $region47: #{render_trans_forward.1} parent=5 // pred_region
      %s398 = ssub.s32 %s13, 1
      %s399 = smul.u32 8, %s23
      %s400 = ssub.s32 10, %s399
      %p401 = scmp.lt.s32.totalorder %s400, 8
      %s402 = scalar_select %p401, %s400, 8
      %s403 = smul.u32 64, %s402
      %s404 = smul.u32 %s403, 2
      %p405 = scmp.lt.s32.totalorder %s22, 1
      %s406 = scalar_select %p405, %s22, 1
      %p407 = scmp.lt.s32.totalorder %s399, 9
      %s408 = scalar_select %p407, %s399, 9
      %s409 = smul.addr %s408, 2
      %s410 = smul.addr %s406, 20
      %s411 = sadd.s32 %s409, %s410
      %s412 = smul.addr %s411, 4
      %s413 = scalar_lea.vmem %s0, %s412
      %p414 = pneg %p53
      %p415 = pneg %p50
      %s416 = sadd.s32 %s23, 1
      %s417 = smul.u32 %s416, 4
      %s418 = smul.u32 2, %s417
      %p419 = scmp.lt.s32.totalorder %s22, 1
      %s420 = scalar_select %p419, %s22, 1
      %p421 = scmp.lt.s32.totalorder %s418, 9
      %s422 = scalar_select %p421, %s418, 9
      %s423 = smul.addr %s422, 2
      %s424 = smul.addr %s420, 20
      %s425 = sadd.s32 %s423, %s424
      %s426 = smul.addr %s425, 4
      %s427 = scalar_lea.vmem %s1, %s426
      %p428 = pneg %p85
      %p429 = pneg %p82
      %s430 = smul.u32 8, %s23
      %s431 = ssub.s32 9, %s430
      %p432 = scmp.lt.s32.totalorder %s431, 8
      %s433 = scalar_select %p432, %s431, 8
      %s434 = smul.u32 64, %s433
      %s435 = smul.u32 %s434, 2
      %p436 = scmp.lt.s32.totalorder %s22, 1
      %s437 = scalar_select %p436, %s22, 1
      %p438 = scmp.lt.s32.totalorder %s430, 8
      %s439 = scalar_select %p438, %s430, 8
      %s440 = smul.addr %s439, 2
      %s441 = smul.addr %s437, 18
      %s442 = sadd.s32 %s440, %s441
      %s443 = smul.addr %s442, 4
      %s444 = scalar_lea.vmem %s2, %s443
      %p445 = pneg %p113
      %p446 = pneg %p110
      %s447 = sadd.s32 %s23, 1
      %s448 = smul.u32 %s447, 8
      %p449 = scmp.lt.s32.totalorder %s22, 1
      %s450 = scalar_select %p449, %s22, 1
      %p451 = scmp.lt.s32.totalorder %s448, 8
      %s452 = scalar_select %p451, %s448, 8
      %s453 = smul.addr %s452, 2
      %s454 = smul.addr %s450, 18
      %s455 = sadd.s32 %s453, %s454
      %s456 = smul.addr %s455, 4
      %s457 = scalar_lea.vmem %s3, %s456
      %p458 = pneg %p145
      %p459 = pneg %p142
      %s460 = smul.u32 8, %s23
      %s461 = ssub.s32 9, %s460
      %p462 = scmp.lt.s32.totalorder %s461, 8
      %s463 = scalar_select %p462, %s461, 8
      %s464 = smul.u32 64, %s463
      %s465 = smul.u32 %s464, 2
      %p466 = scmp.lt.s32.totalorder %s22, 1
      %s467 = scalar_select %p466, %s22, 1
      %p468 = scmp.lt.s32.totalorder %s460, 8
      %s469 = scalar_select %p468, %s460, 8
      %s470 = smul.addr %s469, 2
      %s471 = smul.addr %s467, 18
      %s472 = sadd.s32 %s470, %s471
      %s473 = smul.addr %s472, 4
      %s474 = scalar_lea.vmem %s4, %s473
      %p475 = pneg %p173
      %p476 = pneg %p170
      %p477 = scmp.lt.s32.totalorder %s22, 1
      %s478 = scalar_select %p477, %s22, 1
      %s479 = smul.addr %s478, 14
      %s480 = smul.addr %s479, 4
      %s481 = scalar_lea.vmem %s5, %s480
      %p482 = pneg %p199
      %p483 = pneg %p196
      %p484 = scmp.lt.s32.totalorder %s22, 1
      %s485 = scalar_select %p484, %s22, 1
      %s486 = scalar_lea.vmem %s6, %s485
      %p487 = pneg %p225
      %p488 = pneg %p222
      %p489 = pneg %p253
      %p490 = pneg %p250
      %p491 = scmp.lt.s32.totalorder %s22, 1
      %s492 = scalar_select %p491, %s22, 1
      %p493 = scmp.lt.s32.totalorder %s23, 0
      %s494 = scalar_select %p493, %s23, 0
      %s495 = smul.addr %s494, 8
      %s496 = smul.addr %s492, 8
      %s497 = sadd.s32 %s495, %s496
      %s498 = smul.addr %s497, 4
      %s499 = scalar_lea.vmem %s7, %s498
      %s500 = smul.u32 8, %s23
      %s501 = ssub.s32 10, %s500
      %p502 = scmp.lt.s32.totalorder %s501, 8
      %s503 = scalar_select %p502, %s501, 8
      %s504 = smul.u32 64, %s503
      %s505 = smul.u32 %s504, 2
      %p506 = scmp.lt.s32.totalorder %s22, 1
      %s507 = scalar_select %p506, %s22, 1
      %p508 = scmp.lt.s32.totalorder %s500, 9
      %s509 = scalar_select %p508, %s500, 9
      %s510 = smul.addr %s509, 2
      %s511 = smul.addr %s507, 20
      %s512 = sadd.s32 %s510, %s511
      %s513 = smul.addr %s512, 4
      %s514 = scalar_lea.vmem %s0, %s513
      %s515 = smul.u32 8, %s23
      %s516 = ssub.s32 10, %s515
      %p517 = scmp.lt.s32.totalorder %s516, 8
      %s518 = scalar_select %p517, %s516, 8
      %s519 = smul.u32 64, %s518
      %s520 = smul.u32 %s519, 2
      %s521 = sadd.s32 %s23, 1
      %s522 = smul.u32 %s521, 4
      %s523 = smul.u32 2, %s522
      %p524 = scmp.lt.s32.totalorder %s22, 1
      %s525 = scalar_select %p524, %s22, 1
      %p526 = scmp.lt.s32.totalorder %s523, 9
      %s527 = scalar_select %p526, %s523, 9
      %s528 = smul.addr %s527, 2
      %s529 = smul.addr %s525, 20
      %s530 = sadd.s32 %s528, %s529
      %s531 = smul.addr %s530, 4
      %s532 = scalar_lea.vmem %s1, %s531
      %s533 = sadd.s32 %s23, 1
      %s534 = smul.u32 %s533, 4
      %s535 = smul.u32 2, %s534
      %s536 = smul.u32 8, %s23
      %s537 = ssub.s32 9, %s536
      %p538 = scmp.lt.s32.totalorder %s537, 8
      %s539 = scalar_select %p538, %s537, 8
      %s540 = smul.u32 64, %s539
      %s541 = smul.u32 %s540, 2
      %p542 = scmp.lt.s32.totalorder %s22, 1
      %s543 = scalar_select %p542, %s22, 1
      %p544 = scmp.lt.s32.totalorder %s536, 8
      %s545 = scalar_select %p544, %s536, 8
      %s546 = smul.addr %s545, 2
      %s547 = smul.addr %s543, 18
      %s548 = sadd.s32 %s546, %s547
      %s549 = smul.addr %s548, 4
      %s550 = scalar_lea.vmem %s2, %s549
      %s551 = smul.u32 8, %s23
      %s552 = ssub.s32 9, %s551
      %p553 = scmp.lt.s32.totalorder %s552, 8
      %s554 = scalar_select %p553, %s552, 8
      %s555 = smul.u32 64, %s554
      %s556 = smul.u32 %s555, 2
      %s557 = sadd.s32 %s23, 1
      %s558 = smul.u32 %s557, 8
      %p559 = scmp.lt.s32.totalorder %s22, 1
      %s560 = scalar_select %p559, %s22, 1
      %p561 = scmp.lt.s32.totalorder %s558, 8
      %s562 = scalar_select %p561, %s558, 8
      %s563 = smul.addr %s562, 2
      %s564 = smul.addr %s560, 18
      %s565 = sadd.s32 %s563, %s564
      %s566 = smul.addr %s565, 4
      %s567 = scalar_lea.vmem %s3, %s566
      %s568 = sadd.s32 %s23, 1
      %s569 = smul.u32 %s568, 8
      %s570 = smul.u32 8, %s23
      %s571 = ssub.s32 9, %s570
      %p572 = scmp.lt.s32.totalorder %s571, 8
      %s573 = scalar_select %p572, %s571, 8
      %s574 = smul.u32 64, %s573
      %s575 = smul.u32 %s574, 2
      %p576 = scmp.lt.s32.totalorder %s22, 1
      %s577 = scalar_select %p576, %s22, 1
      %p578 = scmp.lt.s32.totalorder %s570, 8
      %s579 = scalar_select %p578, %s570, 8
      %s580 = smul.addr %s579, 2
      %s581 = smul.addr %s577, 18
      %s582 = sadd.s32 %s580, %s581
      %s583 = smul.addr %s582, 4
      %s584 = scalar_lea.vmem %s4, %s583
      %s585 = smul.u32 8, %s23
      %s586 = ssub.s32 9, %s585
      %p587 = scmp.lt.s32.totalorder %s586, 8
      %s588 = scalar_select %p587, %s586, 8
      %s589 = smul.u32 64, %s588
      %s590 = smul.u32 %s589, 2
      %p591 = scmp.lt.s32.totalorder %s22, 1
      %s592 = scalar_select %p591, %s22, 1
      %s593 = smul.addr %s592, 14
      %s594 = smul.addr %s593, 4
      %s595 = scalar_lea.vmem %s5, %s594
      %p596 = scmp.lt.s32.totalorder %s22, 1
      %s597 = scalar_select %p596, %s22, 1
      %s598 = scalar_lea.vmem %s6, %s597
      %p599 = scmp.lt.s32.totalorder %s22, 1
      %s600 = scalar_select %p599, %s22, 1
      %p601 = scmp.lt.s32.totalorder %s23, 0
      %s602 = scalar_select %p601, %s23, 0
      %s603 = smul.addr %s602, 8
      %s604 = smul.addr %s600, 8
      %s605 = sadd.s32 %s603, %s604
      %s606 = smul.addr %s605, 4
      %s607 = scalar_lea.vmem %s7, %s606
      %v609 = vld [vmem:[%s514] sm:$0xf]
      %v610 = vld [vmem:[%s514 + $0x4] sm:$0x1]
      %v611 = vld [vmem:[%s514 + $0x8] sm:$0xf]
      %v612 = vld [vmem:[%s514 + $0xc] sm:$0x1]
      %v613 = vld [vmem:[%s514 + $0x10] sm:$0xf]
      %v614 = vld [vmem:[%s514 + $0x14] sm:$0x1]
      %v615 = vld [vmem:[%s514 + $0x18] sm:$0xf]
      %v616 = vld [vmem:[%s514 + $0x1c] sm:$0x1]
      %v617 = vld [vmem:[%s514 + $0x20] sm:$0xf]
      %v618 = vld [vmem:[%s514 + $0x24] sm:$0x1]
      %v619 = vld [vmem:[%s514 + $0x28] sm:$0xf]
      %v620 = vld [vmem:[%s514 + $0x2c] sm:$0x1]
      %v621 = vld [vmem:[%s514 + $0x30] sm:$0xf]
      %v622 = vld [vmem:[%s514 + $0x34] sm:$0x1]
      %v623 = vld [vmem:[%s514 + $0x38] sm:$0xf]
      %v624 = vld [vmem:[%s514 + $0x3c] sm:$0x1]
      %vm625 = vcmask 60416
      %626 = vst.msk [vmem:[#allocation2] sm:$0xf] %vm625, %v609
      %vm627 = vcmask 57344
      %628 = vst.msk [vmem:[#allocation2 + $0x4] sm:$0x1] %vm627, %v610
      %629 = vst.msk [vmem:[#allocation2 + $0x8] sm:$0xf] %vm625, %v611
      %630 = vst.msk [vmem:[#allocation2 + $0xc] sm:$0x1] %vm627, %v612
      %631 = vst.msk [vmem:[#allocation2 + $0x10] sm:$0xf] %vm625, %v613
      %632 = vst.msk [vmem:[#allocation2 + $0x14] sm:$0x1] %vm627, %v614
      %633 = vst.msk [vmem:[#allocation2 + $0x18] sm:$0xf] %vm625, %v615
      %634 = vst.msk [vmem:[#allocation2 + $0x1c] sm:$0x1] %vm627, %v616
      %635 = vst.msk [vmem:[#allocation2 + $0x20] sm:$0xf] %vm625, %v617
      %636 = vst.msk [vmem:[#allocation2 + $0x24] sm:$0x1] %vm627, %v618
      %637 = vst.msk [vmem:[#allocation2 + $0x28] sm:$0xf] %vm625, %v619
      %638 = vst.msk [vmem:[#allocation2 + $0x2c] sm:$0x1] %vm627, %v620
      %639 = vst.msk [vmem:[#allocation2 + $0x30] sm:$0xf] %vm625, %v621
      %640 = vst.msk [vmem:[#allocation2 + $0x34] sm:$0x1] %vm627, %v622
      %641 = vst.msk [vmem:[#allocation2 + $0x38] sm:$0xf] %vm625, %v623
      %642 = vst.msk [vmem:[#allocation2 + $0x3c] sm:$0x1] %vm627, %v624
      %v643 = vld [vmem:[%s532] sm:$0xf]
      %v644 = vld [vmem:[%s532 + $0x4] sm:$0x1]
      %v645 = vld [vmem:[%s532 + $0x8] sm:$0xf]
      %v646 = vld [vmem:[%s532 + $0xc] sm:$0x1]
      %s647 = scalar_lea.vmem [#allocation2], 64
      %648 = vst.msk [vmem:[%s647] sm:$0xf] %vm625, %v643
      %649 = vst.msk [vmem:[%s647 + $0x4] sm:$0x1] %vm627, %v644
      %650 = vst.msk [vmem:[%s647 + $0x8] sm:$0xf] %vm625, %v645
      %651 = vst.msk [vmem:[%s647 + $0xc] sm:$0x1] %vm627, %v646
      %v652 = vld [vmem:[%s550] sm:$0xf]
      %v653 = vld [vmem:[%s550 + $0x4] sm:$0x1]
      %v654 = vld [vmem:[%s550 + $0x8] sm:$0xf]
      %v655 = vld [vmem:[%s550 + $0xc] sm:$0x1]
      %v656 = vld [vmem:[%s550 + $0x10] sm:$0xf]
      %v657 = vld [vmem:[%s550 + $0x14] sm:$0x1]
      %v658 = vld [vmem:[%s550 + $0x18] sm:$0xf]
      %v659 = vld [vmem:[%s550 + $0x1c] sm:$0x1]
      %v660 = vld [vmem:[%s550 + $0x20] sm:$0xf]
      %v661 = vld [vmem:[%s550 + $0x24] sm:$0x1]
      %v662 = vld [vmem:[%s550 + $0x28] sm:$0xf]
      %v663 = vld [vmem:[%s550 + $0x2c] sm:$0x1]
      %v664 = vld [vmem:[%s550 + $0x30] sm:$0xf]
      %v665 = vld [vmem:[%s550 + $0x34] sm:$0x1]
      %v666 = vld [vmem:[%s550 + $0x38] sm:$0xf]
      %v667 = vld [vmem:[%s550 + $0x3c] sm:$0x1]
      %668 = vst.msk [vmem:[#allocation3] sm:$0xf] %vm625, %v652
      %vm669 = vcmask 57344
      %vm670 = vsmask.f32 256
      %vm671 = vmand %vm669, %vm670
      %v672 = vld [vmem:[#allocation3 + $0x4] sm:$0x1]
      %v673 = vsel %vm671, %v653, %v672
      %674 = vst [vmem:[#allocation3 + $0x4] sm:$0x1] %v673
      %675 = vst.msk [vmem:[#allocation3 + $0x8] sm:$0xf] %vm625, %v654
      %v676 = vld [vmem:[#allocation3 + $0xc] sm:$0x1]
      %v677 = vsel %vm671, %v655, %v676
      %678 = vst [vmem:[#allocation3 + $0xc] sm:$0x1] %v677
      %679 = vst.msk [vmem:[#allocation3 + $0x10] sm:$0xf] %vm625, %v656
      %v680 = vld [vmem:[#allocation3 + $0x14] sm:$0x1]
      %v681 = vsel %vm671, %v657, %v680
      %682 = vst [vmem:[#allocation3 + $0x14] sm:$0x1] %v681
      %683 = vst.msk [vmem:[#allocation3 + $0x18] sm:$0xf] %vm625, %v658
      %v684 = vld [vmem:[#allocation3 + $0x1c] sm:$0x1]
      %v685 = vsel %vm671, %v659, %v684
      %686 = vst [vmem:[#allocation3 + $0x1c] sm:$0x1] %v685
      %687 = vst.msk [vmem:[#allocation3 + $0x20] sm:$0xf] %vm625, %v660
      %v688 = vld [vmem:[#allocation3 + $0x24] sm:$0x1]
      %v689 = vsel %vm671, %v661, %v688
      %690 = vst [vmem:[#allocation3 + $0x24] sm:$0x1] %v689
      %691 = vst.msk [vmem:[#allocation3 + $0x28] sm:$0xf] %vm625, %v662
      %v692 = vld [vmem:[#allocation3 + $0x2c] sm:$0x1]
      %v693 = vsel %vm671, %v663, %v692
      %694 = vst [vmem:[#allocation3 + $0x2c] sm:$0x1] %v693
      %695 = vst.msk [vmem:[#allocation3 + $0x30] sm:$0xf] %vm625, %v664
      %v696 = vld [vmem:[#allocation3 + $0x34] sm:$0x1]
      %v697 = vsel %vm671, %v665, %v696
      %698 = vst [vmem:[#allocation3 + $0x34] sm:$0x1] %v697
      %699 = vst.msk [vmem:[#allocation3 + $0x38] sm:$0xf] %vm625, %v666
      %v700 = vld [vmem:[#allocation3 + $0x3c] sm:$0x1]
      %v701 = vsel %vm671, %v667, %v700
      %702 = vst [vmem:[#allocation3 + $0x3c] sm:$0x1] %v701
      %v703 = vld [vmem:[%s567] sm:$0xf]
      %v704 = vld [vmem:[%s567 + $0x4] sm:$0x1]
      %s705 = scalar_lea.vmem [#allocation3], 64
      %706 = vst.msk [vmem:[%s705] sm:$0xf] %vm625, %v703
      %v707 = vld [vmem:[%s705 + $0x4] sm:$0x1]
      %v708 = vsel %vm671, %v704, %v707
      %709 = vst [vmem:[%s705 + $0x4] sm:$0x1] %v708
      %v710 = vld [vmem:[#allocation2] sm:$0xf]
      %v711 = vld [vmem:[#allocation2 + $0x8] sm:$0xf]
      %v712 = vld [vmem:[#allocation2 + $0x10] sm:$0xf]
      %v713 = vld [vmem:[#allocation2 + $0x18] sm:$0xf]
      %v714 = vld [vmem:[#allocation2 + $0x20] sm:$0xf]
      %v715 = vld [vmem:[#allocation2 + $0x28] sm:$0xf]
      %v716 = vld [vmem:[#allocation2 + $0x30] sm:$0xf]
      %v717 = vld [vmem:[#allocation2 + $0x38] sm:$0xf]
      %v726 = vunpack.c.l.b16 %v710
      %v727 = vunpack.c.l.b16 %v711
      %v728 = vunpack.c.l.b16 %v712
      %v729 = vunpack.c.l.b16 %v713
      %v730 = vunpack.c.l.b16 %v714
      %v731 = vunpack.c.l.b16 %v715
      %v732 = vunpack.c.l.b16 %v716
      %v733 = vunpack.c.l.b16 %v717
      %v734 = vpack.c.b16 %v727, %v726
      %v735 = vpack.c.b16 %v729, %v728
      %v736 = vpack.c.b16 %v731, %v730
      %v737 = vpack.c.b16 %v733, %v732
      %vm742 = vcmask 64512
      %743 = vst.msk [vmem:[#allocation4] sm:$0xff] %vm742, %v734
      %744 = vst.msk [vmem:[#allocation4 + $0x8] sm:$0xff] %vm742, %v735
      %745 = vst.msk [vmem:[#allocation4 + $0x10] sm:$0xff] %vm742, %v736
      %746 = vst.msk [vmem:[#allocation4 + $0x18] sm:$0xff] %vm742, %v737
      %v747 = vld [vmem:[#allocation2] sm:$0xf]
      %v748 = vld [vmem:[#allocation2 + $0x4] sm:$0x1]
      %v749 = vld [vmem:[#allocation2 + $0x8] sm:$0xf]
      %v750 = vld [vmem:[#allocation2 + $0xc] sm:$0x1]
      %v751 = vld [vmem:[#allocation2 + $0x10] sm:$0xf]
      %v752 = vld [vmem:[#allocation2 + $0x14] sm:$0x1]
      %v753 = vld [vmem:[#allocation2 + $0x18] sm:$0xf]
      %v754 = vld [vmem:[#allocation2 + $0x1c] sm:$0x1]
      %v755 = vld [vmem:[#allocation2 + $0x20] sm:$0xf]
      %v756 = vld [vmem:[#allocation2 + $0x24] sm:$0x1]
      %v757 = vld [vmem:[#allocation2 + $0x28] sm:$0xf]
      %v758 = vld [vmem:[#allocation2 + $0x2c] sm:$0x1]
      %v759 = vld [vmem:[#allocation2 + $0x30] sm:$0xf]
      %v760 = vld [vmem:[#allocation2 + $0x34] sm:$0x1]
      %v761 = vld [vmem:[#allocation2 + $0x38] sm:$0xf]
      %v762 = vld [vmem:[#allocation2 + $0x3c] sm:$0x1]
      %vm763 = vsmask.f32 3328
      %vm764 = vsmask.f32 7440
      %vm765 = vmor %vm763, %vm764
      %v767 = vshrl.u32 %v747, 16
      %v769 = vrot.slane %v767, 4
      %v770 = vshll.u32 %v747, 16
      %v772 = vrot.slane %v770, 5
      %v773 = vor.u32 %v769, %v772
      %v774 = vrot.slane %v773, 4
      %v776 = vshll.u32 %v748, 16
      %v778 = vrot.slane %v776, 5
      %v779 = vsel %vm765, %v774, %v778
      %v781 = vshrl.u32 %v749, 16
      %v783 = vrot.slane %v781, 4
      %v784 = vshll.u32 %v749, 16
      %v786 = vrot.slane %v784, 5
      %v787 = vor.u32 %v783, %v786
      %v788 = vrot.slane %v787, 4
      %v790 = vshll.u32 %v750, 16
      %v792 = vrot.slane %v790, 5
      %v793 = vsel %vm765, %v788, %v792
      %v795 = vshrl.u32 %v751, 16
      %v797 = vrot.slane %v795, 4
      %v798 = vshll.u32 %v751, 16
      %v800 = vrot.slane %v798, 5
      %v801 = vor.u32 %v797, %v800
      %v802 = vrot.slane %v801, 4
      %v804 = vshll.u32 %v752, 16
      %v806 = vrot.slane %v804, 5
      %v807 = vsel %vm765, %v802, %v806
      %v809 = vshrl.u32 %v753, 16
      %v811 = vrot.slane %v809, 4
      %v812 = vshll.u32 %v753, 16
      %v814 = vrot.slane %v812, 5
      %v815 = vor.u32 %v811, %v814
      %v816 = vrot.slane %v815, 4
      %v818 = vshll.u32 %v754, 16
      %v820 = vrot.slane %v818, 5
      %v821 = vsel %vm765, %v816, %v820
      %v823 = vshrl.u32 %v755, 16
      %v825 = vrot.slane %v823, 4
      %v826 = vshll.u32 %v755, 16
      %v828 = vrot.slane %v826, 5
      %v829 = vor.u32 %v825, %v828
      %v830 = vrot.slane %v829, 4
      %v832 = vshll.u32 %v756, 16
      %v834 = vrot.slane %v832, 5
      %v835 = vsel %vm765, %v830, %v834
      %v837 = vshrl.u32 %v757, 16
      %v839 = vrot.slane %v837, 4
      %v840 = vshll.u32 %v757, 16
      %v842 = vrot.slane %v840, 5
      %v843 = vor.u32 %v839, %v842
      %v844 = vrot.slane %v843, 4
      %v846 = vshll.u32 %v758, 16
      %v848 = vrot.slane %v846, 5
      %v849 = vsel %vm765, %v844, %v848
      %v851 = vshrl.u32 %v759, 16
      %v853 = vrot.slane %v851, 4
      %v854 = vshll.u32 %v759, 16
      %v856 = vrot.slane %v854, 5
      %v857 = vor.u32 %v853, %v856
      %v858 = vrot.slane %v857, 4
      %v860 = vshll.u32 %v760, 16
      %v862 = vrot.slane %v860, 5
      %v863 = vsel %vm765, %v858, %v862
      %v865 = vshrl.u32 %v761, 16
      %v867 = vrot.slane %v865, 4
      %v868 = vshll.u32 %v761, 16
      %v870 = vrot.slane %v868, 5
      %v871 = vor.u32 %v867, %v870
      %v872 = vrot.slane %v871, 4
      %v874 = vshll.u32 %v762, 16
      %v876 = vrot.slane %v874, 5
      %v877 = vsel %vm765, %v872, %v876
      %v878 = vunpack.c.l.b16 %v779
      %v879 = vunpack.c.l.b16 %v793
      %v880 = vunpack.c.l.b16 %v807
      %v881 = vunpack.c.l.b16 %v821
      %v882 = vunpack.c.l.b16 %v835
      %v883 = vunpack.c.l.b16 %v849
      %v884 = vunpack.c.l.b16 %v863
      %v885 = vunpack.c.l.b16 %v877
      %v886 = vpack.c.b16 %v879, %v878
      %v887 = vpack.c.b16 %v881, %v880
      %v888 = vpack.c.b16 %v883, %v882
      %v889 = vpack.c.b16 %v885, %v884
      %890 = vrot.lane.b32.xlu0 %v886, 8
      %v891 = vpop.permute.xlu0 %890
      %892 = vrot.lane.b32.xlu0 %v887, 8
      %v893 = vpop.permute.xlu0 %892
      %894 = vrot.lane.b32.xlu0 %v888, 8
      %v895 = vpop.permute.xlu0 %894
      %896 = vrot.lane.b32.xlu0 %v889, 8
      %v897 = vpop.permute.xlu0 %896
      %vm902 = vcmask 130112
      %903 = vst.msk [vmem:[#allocation4] sm:$0xff] %vm902, %v891
      %904 = vst.msk [vmem:[#allocation4 + $0x8] sm:$0xff] %vm902, %v893
      %905 = vst.msk [vmem:[#allocation4 + $0x10] sm:$0xff] %vm902, %v895
      %906 = vst.msk [vmem:[#allocation4 + $0x18] sm:$0xff] %vm902, %v897
      %v907 = vld [vmem:[#allocation2] sm:$0xe]
      %v908 = vld [vmem:[#allocation2 + $0x4] sm:$0x1]
      %v909 = vld [vmem:[#allocation2 + $0x8] sm:$0xe]
      %v910 = vld [vmem:[#allocation2 + $0xc] sm:$0x1]
      %v911 = vld [vmem:[#allocation2 + $0x10] sm:$0xe]
      %v912 = vld [vmem:[#allocation2 + $0x14] sm:$0x1]
      %v913 = vld [vmem:[#allocation2 + $0x18] sm:$0xe]
      %v914 = vld [vmem:[#allocation2 + $0x1c] sm:$0x1]
      %v915 = vld [vmem:[#allocation2 + $0x20] sm:$0xe]
      %v916 = vld [vmem:[#allocation2 + $0x24] sm:$0x1]
      %v917 = vld [vmem:[#allocation2 + $0x28] sm:$0xe]
      %v918 = vld [vmem:[#allocation2 + $0x2c] sm:$0x1]
      %v919 = vld [vmem:[#allocation2 + $0x30] sm:$0xe]
      %v920 = vld [vmem:[#allocation2 + $0x34] sm:$0x1]
      %v921 = vld [vmem:[#allocation2 + $0x38] sm:$0xe]
      %v922 = vld [vmem:[#allocation2 + $0x3c] sm:$0x1]
      %vm939 = vcmask 1042432
      %vm940 = vcmask 1046532
      %vm941 = vmor %vm939, %vm940
      %v942 = vrot.slane %v907, 5
      %v943 = vrot.slane %v942, 4
      %v944 = vrot.slane %v908, 5
      %v945 = vsel %vm941, %v943, %v944
      %v946 = vrot.slane %v909, 5
      %v947 = vrot.slane %v946, 4
      %v948 = vrot.slane %v910, 5
      %v949 = vsel %vm941, %v947, %v948
      %v950 = vrot.slane %v911, 5
      %v951 = vrot.slane %v950, 4
      %v952 = vrot.slane %v912, 5
      %v953 = vsel %vm941, %v951, %v952
      %v954 = vrot.slane %v913, 5
      %v955 = vrot.slane %v954, 4
      %v956 = vrot.slane %v914, 5
      %v957 = vsel %vm941, %v955, %v956
      %v958 = vrot.slane %v915, 5
      %v959 = vrot.slane %v958, 4
      %v960 = vrot.slane %v916, 5
      %v961 = vsel %vm941, %v959, %v960
      %v962 = vrot.slane %v917, 5
      %v963 = vrot.slane %v962, 4
      %v964 = vrot.slane %v918, 5
      %v965 = vsel %vm941, %v963, %v964
      %v966 = vrot.slane %v919, 5
      %v967 = vrot.slane %v966, 4
      %v968 = vrot.slane %v920, 5
      %v969 = vsel %vm941, %v967, %v968
      %v970 = vrot.slane %v921, 5
      %v971 = vrot.slane %v970, 4
      %v972 = vrot.slane %v922, 5
      %v973 = vsel %vm941, %v971, %v972
      %v974 = vunpack.c.l.b16 %v945
      %v975 = vunpack.c.l.b16 %v949
      %v976 = vunpack.c.l.b16 %v953
      %v977 = vunpack.c.l.b16 %v957
      %v978 = vunpack.c.l.b16 %v961
      %v979 = vunpack.c.l.b16 %v965
      %v980 = vunpack.c.l.b16 %v969
      %v981 = vunpack.c.l.b16 %v973
      %v982 = vpack.c.b16 %v975, %v974
      %v983 = vpack.c.b16 %v977, %v976
      %v984 = vpack.c.b16 %v979, %v978
      %v985 = vpack.c.b16 %v981, %v980
      %986 = vrot.lane.b32.xlu0 %v982, 16
      %v987 = vpop.permute.xlu0 %986
      %988 = vrot.lane.b32.xlu0 %v983, 16
      %v989 = vpop.permute.xlu0 %988
      %990 = vrot.lane.b32.xlu0 %v984, 16
      %v991 = vpop.permute.xlu0 %990
      %992 = vrot.lane.b32.xlu0 %v985, 16
      %v993 = vpop.permute.xlu0 %992
      %vm998 = vcmask 195712
      %999 = vst.msk [vmem:[#allocation4] sm:$0xff] %vm998, %v987
      %1000 = vst.msk [vmem:[#allocation4 + $0x8] sm:$0xff] %vm998, %v989
      %1001 = vst.msk [vmem:[#allocation4 + $0x10] sm:$0xff] %vm998, %v991
      %1002 = vst.msk [vmem:[#allocation4 + $0x18] sm:$0xff] %vm998, %v993
      %s1003 = scalar_lea.vmem [#allocation2], 8
      %v1004 = vld [vmem:[%s1003] sm:$0xf]
      %v1005 = vld [vmem:[%s1003 + $0x8] sm:$0xf]
      %v1006 = vld [vmem:[%s1003 + $0x10] sm:$0xf]
      %v1007 = vld [vmem:[%s1003 + $0x18] sm:$0xf]
      %v1008 = vld [vmem:[%s1003 + $0x20] sm:$0xf]
      %v1009 = vld [vmem:[%s1003 + $0x28] sm:$0xf]
      %v1010 = vld [vmem:[%s1003 + $0x30] sm:$0xf]
      %v1011 = vld [vmem:[%s1003 + $0x38] sm:$0xf]
      %v1020 = vunpack.c.l.b16 %v1004
      %v1021 = vunpack.c.l.b16 %v1005
      %v1022 = vunpack.c.l.b16 %v1006
      %v1023 = vunpack.c.l.b16 %v1007
      %v1024 = vunpack.c.l.b16 %v1008
      %v1025 = vunpack.c.l.b16 %v1009
      %v1026 = vunpack.c.l.b16 %v1010
      %v1027 = vunpack.c.l.b16 %v1011
      %v1028 = vpack.c.b16 %v1021, %v1020
      %v1029 = vpack.c.b16 %v1023, %v1022
      %v1030 = vpack.c.b16 %v1025, %v1024
      %v1031 = vpack.c.b16 %v1027, %v1026
      %1032 = vrot.lane.b32.xlu0 %v1028, 24
      %v1033 = vpop.permute.xlu0 %1032
      %1034 = vrot.lane.b32.xlu0 %v1029, 24
      %v1035 = vpop.permute.xlu0 %1034
      %1036 = vrot.lane.b32.xlu0 %v1030, 24
      %v1037 = vpop.permute.xlu0 %1036
      %1038 = vrot.lane.b32.xlu0 %v1031, 24
      %v1039 = vpop.permute.xlu0 %1038
      %vm1044 = vcmask 261312
      %1045 = vst.msk [vmem:[#allocation4] sm:$0xff] %vm1044, %v1033
      %1046 = vst.msk [vmem:[#allocation4 + $0x8] sm:$0xff] %vm1044, %v1035
      %1047 = vst.msk [vmem:[#allocation4 + $0x10] sm:$0xff] %vm1044, %v1037
      %1048 = vst.msk [vmem:[#allocation4 + $0x18] sm:$0xff] %vm1044, %v1039
      %v1049 = vld [vmem:[%s1003] sm:$0xf]
      %v1050 = vld [vmem:[%s1003 + $0x4] sm:$0x1]
      %v1051 = vld [vmem:[%s1003 + $0x8] sm:$0xf]
      %v1052 = vld [vmem:[%s1003 + $0xc] sm:$0x1]
      %v1053 = vld [vmem:[%s1003 + $0x10] sm:$0xf]
      %v1054 = vld [vmem:[%s1003 + $0x14] sm:$0x1]
      %v1055 = vld [vmem:[%s1003 + $0x18] sm:$0xf]
      %v1056 = vld [vmem:[%s1003 + $0x1c] sm:$0x1]
      %v1057 = vld [vmem:[%s1003 + $0x20] sm:$0xf]
      %v1058 = vld [vmem:[%s1003 + $0x24] sm:$0x1]
      %v1059 = vld [vmem:[%s1003 + $0x28] sm:$0xf]
      %v1060 = vld [vmem:[%s1003 + $0x2c] sm:$0x1]
      %v1061 = vld [vmem:[%s1003 + $0x30] sm:$0xf]
      %v1062 = vld [vmem:[%s1003 + $0x34] sm:$0x1]
      %v1063 = vld [vmem:[%s1003 + $0x38] sm:$0xf]
      %v1064 = vld [vmem:[%s1003 + $0x3c] sm:$0x1]
      %v1066 = vshrl.u32 %v1049, 16
      %v1068 = vrot.slane %v1066, 4
      %v1069 = vshll.u32 %v1049, 16
      %v1071 = vrot.slane %v1069, 5
      %v1072 = vor.u32 %v1068, %v1071
      %v1073 = vrot.slane %v1072, 4
      %v1075 = vshll.u32 %v1050, 16
      %v1077 = vrot.slane %v1075, 5
      %v1078 = vsel %vm765, %v1073, %v1077
      %v1080 = vshrl.u32 %v1051, 16
      %v1082 = vrot.slane %v1080, 4
      %v1083 = vshll.u32 %v1051, 16
      %v1085 = vrot.slane %v1083, 5
      %v1086 = vor.u32 %v1082, %v1085
      %v1087 = vrot.slane %v1086, 4
      %v1089 = vshll.u32 %v1052, 16
      %v1091 = vrot.slane %v1089, 5
      %v1092 = vsel %vm765, %v1087, %v1091
      %v1094 = vshrl.u32 %v1053, 16
      %v1096 = vrot.slane %v1094, 4
      %v1097 = vshll.u32 %v1053, 16
      %v1099 = vrot.slane %v1097, 5
      %v1100 = vor.u32 %v1096, %v1099
      %v1101 = vrot.slane %v1100, 4
      %v1103 = vshll.u32 %v1054, 16
      %v1105 = vrot.slane %v1103, 5
      %v1106 = vsel %vm765, %v1101, %v1105
      %v1108 = vshrl.u32 %v1055, 16
      %v1110 = vrot.slane %v1108, 4
      %v1111 = vshll.u32 %v1055, 16
      %v1113 = vrot.slane %v1111, 5
      %v1114 = vor.u32 %v1110, %v1113
      %v1115 = vrot.slane %v1114, 4
      %v1117 = vshll.u32 %v1056, 16
      %v1119 = vrot.slane %v1117, 5
      %v1120 = vsel %vm765, %v1115, %v1119
      %v1122 = vshrl.u32 %v1057, 16
      %v1124 = vrot.slane %v1122, 4
      %v1125 = vshll.u32 %v1057, 16
      %v1127 = vrot.slane %v1125, 5
      %v1128 = vor.u32 %v1124, %v1127
      %v1129 = vrot.slane %v1128, 4
      %v1131 = vshll.u32 %v1058, 16
      %v1133 = vrot.slane %v1131, 5
      %v1134 = vsel %vm765, %v1129, %v1133
      %v1136 = vshrl.u32 %v1059, 16
      %v1138 = vrot.slane %v1136, 4
      %v1139 = vshll.u32 %v1059, 16
      %v1141 = vrot.slane %v1139, 5
      %v1142 = vor.u32 %v1138, %v1141
      %v1143 = vrot.slane %v1142, 4
      %v1145 = vshll.u32 %v1060, 16
      %v1147 = vrot.slane %v1145, 5
      %v1148 = vsel %vm765, %v1143, %v1147
      %v1150 = vshrl.u32 %v1061, 16
      %v1152 = vrot.slane %v1150, 4
      %v1153 = vshll.u32 %v1061, 16
      %v1155 = vrot.slane %v1153, 5
      %v1156 = vor.u32 %v1152, %v1155
      %v1157 = vrot.slane %v1156, 4
      %v1159 = vshll.u32 %v1062, 16
      %v1161 = vrot.slane %v1159, 5
      %v1162 = vsel %vm765, %v1157, %v1161
      %v1164 = vshrl.u32 %v1063, 16
      %v1166 = vrot.slane %v1164, 4
      %v1167 = vshll.u32 %v1063, 16
      %v1169 = vrot.slane %v1167, 5
      %v1170 = vor.u32 %v1166, %v1169
      %v1171 = vrot.slane %v1170, 4
      %v1173 = vshll.u32 %v1064, 16
      %v1175 = vrot.slane %v1173, 5
      %v1176 = vsel %vm765, %v1171, %v1175
      %v1177 = vunpack.c.l.b16 %v1078
      %v1178 = vunpack.c.l.b16 %v1092
      %v1179 = vunpack.c.l.b16 %v1106
      %v1180 = vunpack.c.l.b16 %v1120
      %v1181 = vunpack.c.l.b16 %v1134
      %v1182 = vunpack.c.l.b16 %v1148
      %v1183 = vunpack.c.l.b16 %v1162
      %v1184 = vunpack.c.l.b16 %v1176
      %v1185 = vpack.c.b16 %v1178, %v1177
      %v1186 = vpack.c.b16 %v1180, %v1179
      %v1187 = vpack.c.b16 %v1182, %v1181
      %v1188 = vpack.c.b16 %v1184, %v1183
      %1189 = vrot.lane.b32.xlu0 %v1185, 32
      %v1190 = vpop.permute.xlu0 %1189
      %1191 = vrot.lane.b32.xlu0 %v1186, 32
      %v1192 = vpop.permute.xlu0 %1191
      %1193 = vrot.lane.b32.xlu0 %v1187, 32
      %v1194 = vpop.permute.xlu0 %1193
      %1195 = vrot.lane.b32.xlu0 %v1188, 32
      %v1196 = vpop.permute.xlu0 %1195
      %vm1201 = vcmask 326912
      %1202 = vst.msk [vmem:[#allocation4] sm:$0xff] %vm1201, %v1190
      %1203 = vst.msk [vmem:[#allocation4 + $0x8] sm:$0xff] %vm1201, %v1192
      %1204 = vst.msk [vmem:[#allocation4 + $0x10] sm:$0xff] %vm1201, %v1194
      %1205 = vst.msk [vmem:[#allocation4 + $0x18] sm:$0xff] %vm1201, %v1196
      %v1206 = vld [vmem:[%s1003] sm:$0xe]
      %v1207 = vld [vmem:[%s1003 + $0x4] sm:$0x1]
      %v1208 = vld [vmem:[%s1003 + $0x8] sm:$0xe]
      %v1209 = vld [vmem:[%s1003 + $0xc] sm:$0x1]
      %v1210 = vld [vmem:[%s1003 + $0x10] sm:$0xe]
      %v1211 = vld [vmem:[%s1003 + $0x14] sm:$0x1]
      %v1212 = vld [vmem:[%s1003 + $0x18] sm:$0xe]
      %v1213 = vld [vmem:[%s1003 + $0x1c] sm:$0x1]
      %v1214 = vld [vmem:[%s1003 + $0x20] sm:$0xe]
      %v1215 = vld [vmem:[%s1003 + $0x24] sm:$0x1]
      %v1216 = vld [vmem:[%s1003 + $0x28] sm:$0xe]
      %v1217 = vld [vmem:[%s1003 + $0x2c] sm:$0x1]
      %v1218 = vld [vmem:[%s1003 + $0x30] sm:$0xe]
      %v1219 = vld [vmem:[%s1003 + $0x34] sm:$0x1]
      %v1220 = vld [vmem:[%s1003 + $0x38] sm:$0xe]
      %v1221 = vld [vmem:[%s1003 + $0x3c] sm:$0x1]
      %v1238 = vrot.slane %v1206, 5
      %v1239 = vrot.slane %v1238, 4
      %v1240 = vrot.slane %v1207, 5
      %v1241 = vsel %vm941, %v1239, %v1240
      %v1242 = vrot.slane %v1208, 5
      %v1243 = vrot.slane %v1242, 4
      %v1244 = vrot.slane %v1209, 5
      %v1245 = vsel %vm941, %v1243, %v1244
      %v1246 = vrot.slane %v1210, 5
      %v1247 = vrot.slane %v1246, 4
      %v1248 = vrot.slane %v1211, 5
      %v1249 = vsel %vm941, %v1247, %v1248
      %v1250 = vrot.slane %v1212, 5
      %v1251 = vrot.slane %v1250, 4
      %v1252 = vrot.slane %v1213, 5
      %v1253 = vsel %vm941, %v1251, %v1252
      %v1254 = vrot.slane %v1214, 5
      %v1255 = vrot.slane %v1254, 4
      %v1256 = vrot.slane %v1215, 5
      %v1257 = vsel %vm941, %v1255, %v1256
      %v1258 = vrot.slane %v1216, 5
      %v1259 = vrot.slane %v1258, 4
      %v1260 = vrot.slane %v1217, 5
      %v1261 = vsel %vm941, %v1259, %v1260
      %v1262 = vrot.slane %v1218, 5
      %v1263 = vrot.slane %v1262, 4
      %v1264 = vrot.slane %v1219, 5
      %v1265 = vsel %vm941, %v1263, %v1264
      %v1266 = vrot.slane %v1220, 5
      %v1267 = vrot.slane %v1266, 4
      %v1268 = vrot.slane %v1221, 5
      %v1269 = vsel %vm941, %v1267, %v1268
      %v1270 = vunpack.c.l.b16 %v1241
      %v1271 = vunpack.c.l.b16 %v1245
      %v1272 = vunpack.c.l.b16 %v1249
      %v1273 = vunpack.c.l.b16 %v1253
      %v1274 = vunpack.c.l.b16 %v1257
      %v1275 = vunpack.c.l.b16 %v1261
      %v1276 = vunpack.c.l.b16 %v1265
      %v1277 = vunpack.c.l.b16 %v1269
      %v1278 = vpack.c.b16 %v1271, %v1270
      %v1279 = vpack.c.b16 %v1273, %v1272
      %v1280 = vpack.c.b16 %v1275, %v1274
      %v1281 = vpack.c.b16 %v1277, %v1276
      %1282 = vrot.lane.b32.xlu0 %v1278, 40
      %v1283 = vpop.permute.xlu0 %1282
      %1284 = vrot.lane.b32.xlu0 %v1279, 40
      %v1285 = vpop.permute.xlu0 %1284
      %1286 = vrot.lane.b32.xlu0 %v1280, 40
      %v1287 = vpop.permute.xlu0 %1286
      %1288 = vrot.lane.b32.xlu0 %v1281, 40
      %v1289 = vpop.permute.xlu0 %1288
      %vm1294 = vcmask 392512
      %1295 = vst.msk [vmem:[#allocation4] sm:$0xff] %vm1294, %v1283
      %1296 = vst.msk [vmem:[#allocation4 + $0x8] sm:$0xff] %vm1294, %v1285
      %1297 = vst.msk [vmem:[#allocation4 + $0x10] sm:$0xff] %vm1294, %v1287
      %1298 = vst.msk [vmem:[#allocation4 + $0x18] sm:$0xff] %vm1294, %v1289
      %s1299 = scalar_lea.vmem [#allocation2], 16
      %v1300 = vld [vmem:[%s1299] sm:$0xf]
      %v1301 = vld [vmem:[%s1299 + $0x8] sm:$0xf]
      %v1302 = vld [vmem:[%s1299 + $0x10] sm:$0xf]
      %v1303 = vld [vmem:[%s1299 + $0x18] sm:$0xf]
      %v1304 = vld [vmem:[%s1299 + $0x20] sm:$0xf]
      %v1305 = vld [vmem:[%s1299 + $0x28] sm:$0xf]
      %v1306 = vld [vmem:[%s1299 + $0x30] sm:$0xf]
      %v1307 = vld [vmem:[%s1299 + $0x38] sm:$0xf]
      %v1316 = vunpack.c.l.b16 %v1300
      %v1317 = vunpack.c.l.b16 %v1301
      %v1318 = vunpack.c.l.b16 %v1302
      %v1319 = vunpack.c.l.b16 %v1303
      %v1320 = vunpack.c.l.b16 %v1304
      %v1321 = vunpack.c.l.b16 %v1305
      %v1322 = vunpack.c.l.b16 %v1306
      %v1323 = vunpack.c.l.b16 %v1307
      %v1324 = vpack.c.b16 %v1317, %v1316
      %v1325 = vpack.c.b16 %v1319, %v1318
      %v1326 = vpack.c.b16 %v1321, %v1320
      %v1327 = vpack.c.b16 %v1323, %v1322
      %1328 = vrot.lane.b32.xlu0 %v1324, 48
      %v1329 = vpop.permute.xlu0 %1328
      %1330 = vrot.lane.b32.xlu0 %v1325, 48
      %v1331 = vpop.permute.xlu0 %1330
      %1332 = vrot.lane.b32.xlu0 %v1326, 48
      %v1333 = vpop.permute.xlu0 %1332
      %1334 = vrot.lane.b32.xlu0 %v1327, 48
      %v1335 = vpop.permute.xlu0 %1334
      %vm1340 = vcmask 458112
      %1341 = vst.msk [vmem:[#allocation4] sm:$0xff] %vm1340, %v1329
      %1342 = vst.msk [vmem:[#allocation4 + $0x8] sm:$0xff] %vm1340, %v1331
      %1343 = vst.msk [vmem:[#allocation4 + $0x10] sm:$0xff] %vm1340, %v1333
      %1344 = vst.msk [vmem:[#allocation4 + $0x18] sm:$0xff] %vm1340, %v1335
      %v1345 = vld [vmem:[%s1299] sm:$0xf]
      %v1346 = vld [vmem:[%s1299 + $0x4] sm:$0x1]
      %v1347 = vld [vmem:[%s1299 + $0x8] sm:$0xf]
      %v1348 = vld [vmem:[%s1299 + $0xc] sm:$0x1]
      %v1349 = vld [vmem:[%s1299 + $0x10] sm:$0xf]
      %v1350 = vld [vmem:[%s1299 + $0x14] sm:$0x1]
      %v1351 = vld [vmem:[%s1299 + $0x18] sm:$0xf]
      %v1352 = vld [vmem:[%s1299 + $0x1c] sm:$0x1]
      %v1353 = vld [vmem:[%s1299 + $0x20] sm:$0xf]
      %v1354 = vld [vmem:[%s1299 + $0x24] sm:$0x1]
      %v1355 = vld [vmem:[%s1299 + $0x28] sm:$0xf]
      %v1356 = vld [vmem:[%s1299 + $0x2c] sm:$0x1]
      %v1357 = vld [vmem:[%s1299 + $0x30] sm:$0xf]
      %v1358 = vld [vmem:[%s1299 + $0x34] sm:$0x1]
      %v1359 = vld [vmem:[%s1299 + $0x38] sm:$0xf]
      %v1360 = vld [vmem:[%s1299 + $0x3c] sm:$0x1]
      %v1362 = vshrl.u32 %v1345, 16
      %v1364 = vrot.slane %v1362, 4
      %v1365 = vshll.u32 %v1345, 16
      %v1367 = vrot.slane %v1365, 5
      %v1368 = vor.u32 %v1364, %v1367
      %v1369 = vrot.slane %v1368, 4
      %v1371 = vshll.u32 %v1346, 16
      %v1373 = vrot.slane %v1371, 5
      %v1374 = vsel %vm765, %v1369, %v1373
      %v1376 = vshrl.u32 %v1347, 16
      %v1378 = vrot.slane %v1376, 4
      %v1379 = vshll.u32 %v1347, 16
      %v1381 = vrot.slane %v1379, 5
      %v1382 = vor.u32 %v1378, %v1381
      %v1383 = vrot.slane %v1382, 4
      %v1385 = vshll.u32 %v1348, 16
      %v1387 = vrot.slane %v1385, 5
      %v1388 = vsel %vm765, %v1383, %v1387
      %v1390 = vshrl.u32 %v1349, 16
      %v1392 = vrot.slane %v1390, 4
      %v1393 = vshll.u32 %v1349, 16
      %v1395 = vrot.slane %v1393, 5
      %v1396 = vor.u32 %v1392, %v1395
      %v1397 = vrot.slane %v1396, 4
      %v1399 = vshll.u32 %v1350, 16
      %v1401 = vrot.slane %v1399, 5
      %v1402 = vsel %vm765, %v1397, %v1401
      %v1404 = vshrl.u32 %v1351, 16
      %v1406 = vrot.slane %v1404, 4
      %v1407 = vshll.u32 %v1351, 16
      %v1409 = vrot.slane %v1407, 5
      %v1410 = vor.u32 %v1406, %v1409
      %v1411 = vrot.slane %v1410, 4
      %v1413 = vshll.u32 %v1352, 16
      %v1415 = vrot.slane %v1413, 5
      %v1416 = vsel %vm765, %v1411, %v1415
      %v1418 = vshrl.u32 %v1353, 16
      %v1420 = vrot.slane %v1418, 4
      %v1421 = vshll.u32 %v1353, 16
      %v1423 = vrot.slane %v1421, 5
      %v1424 = vor.u32 %v1420, %v1423
      %v1425 = vrot.slane %v1424, 4
      %v1427 = vshll.u32 %v1354, 16
      %v1429 = vrot.slane %v1427, 5
      %v1430 = vsel %vm765, %v1425, %v1429
      %v1432 = vshrl.u32 %v1355, 16
      %v1434 = vrot.slane %v1432, 4
      %v1435 = vshll.u32 %v1355, 16
      %v1437 = vrot.slane %v1435, 5
      %v1438 = vor.u32 %v1434, %v1437
      %v1439 = vrot.slane %v1438, 4
      %v1441 = vshll.u32 %v1356, 16
      %v1443 = vrot.slane %v1441, 5
      %v1444 = vsel %vm765, %v1439, %v1443
      %v1446 = vshrl.u32 %v1357, 16
      %v1448 = vrot.slane %v1446, 4
      %v1449 = vshll.u32 %v1357, 16
      %v1451 = vrot.slane %v1449, 5
      %v1452 = vor.u32 %v1448, %v1451
      %v1453 = vrot.slane %v1452, 4
      %v1455 = vshll.u32 %v1358, 16
      %v1457 = vrot.slane %v1455, 5
      %v1458 = vsel %vm765, %v1453, %v1457
      %v1460 = vshrl.u32 %v1359, 16
      %v1462 = vrot.slane %v1460, 4
      %v1463 = vshll.u32 %v1359, 16
      %v1465 = vrot.slane %v1463, 5
      %v1466 = vor.u32 %v1462, %v1465
      %v1467 = vrot.slane %v1466, 4
      %v1469 = vshll.u32 %v1360, 16
      %v1471 = vrot.slane %v1469, 5
      %v1472 = vsel %vm765, %v1467, %v1471
      %v1473 = vunpack.c.l.b16 %v1374
      %v1474 = vunpack.c.l.b16 %v1388
      %v1475 = vunpack.c.l.b16 %v1402
      %v1476 = vunpack.c.l.b16 %v1416
      %v1477 = vunpack.c.l.b16 %v1430
      %v1478 = vunpack.c.l.b16 %v1444
      %v1479 = vunpack.c.l.b16 %v1458
      %v1480 = vunpack.c.l.b16 %v1472
      %v1481 = vpack.c.b16 %v1474, %v1473
      %v1482 = vpack.c.b16 %v1476, %v1475
      %v1483 = vpack.c.b16 %v1478, %v1477
      %v1484 = vpack.c.b16 %v1480, %v1479
      %1485 = vrot.lane.b32.xlu0 %v1481, 56
      %v1486 = vpop.permute.xlu0 %1485
      %1487 = vrot.lane.b32.xlu0 %v1482, 56
      %v1488 = vpop.permute.xlu0 %1487
      %1489 = vrot.lane.b32.xlu0 %v1483, 56
      %v1490 = vpop.permute.xlu0 %1489
      %1491 = vrot.lane.b32.xlu0 %v1484, 56
      %v1492 = vpop.permute.xlu0 %1491
      %vm1497 = vcmask 523712
      %1498 = vst.msk [vmem:[#allocation4] sm:$0xff] %vm1497, %v1486
      %1499 = vst.msk [vmem:[#allocation4 + $0x8] sm:$0xff] %vm1497, %v1488
      %1500 = vst.msk [vmem:[#allocation4 + $0x10] sm:$0xff] %vm1497, %v1490
      %1501 = vst.msk [vmem:[#allocation4 + $0x18] sm:$0xff] %vm1497, %v1492
      %v1502 = vld [vmem:[%s1299] sm:$0xe]
      %v1503 = vld [vmem:[%s1299 + $0x4] sm:$0x1]
      %v1504 = vld [vmem:[%s1299 + $0x8] sm:$0xe]
      %v1505 = vld [vmem:[%s1299 + $0xc] sm:$0x1]
      %v1506 = vld [vmem:[%s1299 + $0x10] sm:$0xe]
      %v1507 = vld [vmem:[%s1299 + $0x14] sm:$0x1]
      %v1508 = vld [vmem:[%s1299 + $0x18] sm:$0xe]
      %v1509 = vld [vmem:[%s1299 + $0x1c] sm:$0x1]
      %v1510 = vld [vmem:[%s1299 + $0x20] sm:$0xe]
      %v1511 = vld [vmem:[%s1299 + $0x24] sm:$0x1]
      %v1512 = vld [vmem:[%s1299 + $0x28] sm:$0xe]
      %v1513 = vld [vmem:[%s1299 + $0x2c] sm:$0x1]
      %v1514 = vld [vmem:[%s1299 + $0x30] sm:$0xe]
      %v1515 = vld [vmem:[%s1299 + $0x34] sm:$0x1]
      %v1516 = vld [vmem:[%s1299 + $0x38] sm:$0xe]
      %v1517 = vld [vmem:[%s1299 + $0x3c] sm:$0x1]
      %v1534 = vrot.slane %v1502, 5
      %v1535 = vrot.slane %v1534, 4
      %v1536 = vrot.slane %v1503, 5
      %v1537 = vsel %vm941, %v1535, %v1536
      %v1538 = vrot.slane %v1504, 5
      %v1539 = vrot.slane %v1538, 4
      %v1540 = vrot.slane %v1505, 5
      %v1541 = vsel %vm941, %v1539, %v1540
      %v1542 = vrot.slane %v1506, 5
      %v1543 = vrot.slane %v1542, 4
      %v1544 = vrot.slane %v1507, 5
      %v1545 = vsel %vm941, %v1543, %v1544
      %v1546 = vrot.slane %v1508, 5
      %v1547 = vrot.slane %v1546, 4
      %v1548 = vrot.slane %v1509, 5
      %v1549 = vsel %vm941, %v1547, %v1548
      %v1550 = vrot.slane %v1510, 5
      %v1551 = vrot.slane %v1550, 4
      %v1552 = vrot.slane %v1511, 5
      %v1553 = vsel %vm941, %v1551, %v1552
      %v1554 = vrot.slane %v1512, 5
      %v1555 = vrot.slane %v1554, 4
      %v1556 = vrot.slane %v1513, 5
      %v1557 = vsel %vm941, %v1555, %v1556
      %v1558 = vrot.slane %v1514, 5
      %v1559 = vrot.slane %v1558, 4
      %v1560 = vrot.slane %v1515, 5
      %v1561 = vsel %vm941, %v1559, %v1560
      %v1562 = vrot.slane %v1516, 5
      %v1563 = vrot.slane %v1562, 4
      %v1564 = vrot.slane %v1517, 5
      %v1565 = vsel %vm941, %v1563, %v1564
      %v1566 = vunpack.c.l.b16 %v1537
      %v1567 = vunpack.c.l.b16 %v1541
      %v1568 = vunpack.c.l.b16 %v1545
      %v1569 = vunpack.c.l.b16 %v1549
      %v1570 = vunpack.c.l.b16 %v1553
      %v1571 = vunpack.c.l.b16 %v1557
      %v1572 = vunpack.c.l.b16 %v1561
      %v1573 = vunpack.c.l.b16 %v1565
      %v1574 = vpack.c.b16 %v1567, %v1566
      %v1575 = vpack.c.b16 %v1569, %v1568
      %v1576 = vpack.c.b16 %v1571, %v1570
      %v1577 = vpack.c.b16 %v1573, %v1572
      %1578 = vrot.lane.b32.xlu0 %v1574, 64
      %v1579 = vpop.permute.xlu0 %1578
      %1580 = vrot.lane.b32.xlu0 %v1575, 64
      %v1581 = vpop.permute.xlu0 %1580
      %1582 = vrot.lane.b32.xlu0 %v1576, 64
      %v1583 = vpop.permute.xlu0 %1582
      %1584 = vrot.lane.b32.xlu0 %v1577, 64
      %v1585 = vpop.permute.xlu0 %1584
      %vm1590 = vcmask 589312
      %1591 = vst.msk [vmem:[#allocation4] sm:$0xff] %vm1590, %v1579
      %1592 = vst.msk [vmem:[#allocation4 + $0x8] sm:$0xff] %vm1590, %v1581
      %1593 = vst.msk [vmem:[#allocation4 + $0x10] sm:$0xff] %vm1590, %v1583
      %1594 = vst.msk [vmem:[#allocation4 + $0x18] sm:$0xff] %vm1590, %v1585
      %v1595 = vld [vmem:[#allocation3] sm:$0xf]
      %v1596 = vld [vmem:[#allocation3 + $0x8] sm:$0xf]
      %v1597 = vld [vmem:[#allocation3 + $0x10] sm:$0xf]
      %v1598 = vld [vmem:[#allocation3 + $0x18] sm:$0xf]
      %v1599 = vld [vmem:[#allocation3 + $0x20] sm:$0xf]
      %v1600 = vld [vmem:[#allocation3 + $0x28] sm:$0xf]
      %v1601 = vld [vmem:[#allocation3 + $0x30] sm:$0xf]
      %v1602 = vld [vmem:[#allocation3 + $0x38] sm:$0xf]
      %v1611 = vunpack.c.l.b16 %v1595
      %v1612 = vunpack.c.l.b16 %v1596
      %v1613 = vunpack.c.l.b16 %v1597
      %v1614 = vunpack.c.l.b16 %v1598
      %v1615 = vunpack.c.l.b16 %v1599
      %v1616 = vunpack.c.l.b16 %v1600
      %v1617 = vunpack.c.l.b16 %v1601
      %v1618 = vunpack.c.l.b16 %v1602
      %v1619 = vpack.c.b16 %v1612, %v1611
      %v1620 = vpack.c.b16 %v1614, %v1613
      %v1621 = vpack.c.b16 %v1616, %v1615
      %v1622 = vpack.c.b16 %v1618, %v1617
      %1623 = vrot.lane.b32.xlu0 %v1619, 72
      %v1624 = vpop.permute.xlu0 %1623
      %1625 = vrot.lane.b32.xlu0 %v1620, 72
      %v1626 = vpop.permute.xlu0 %1625
      %1627 = vrot.lane.b32.xlu0 %v1621, 72
      %v1628 = vpop.permute.xlu0 %1627
      %1629 = vrot.lane.b32.xlu0 %v1622, 72
      %v1630 = vpop.permute.xlu0 %1629
      %vm1635 = vcmask 622144
      %1636 = vst.msk [vmem:[#allocation4] sm:$0xff] %vm1635, %v1624
      %1637 = vst.msk [vmem:[#allocation4 + $0x8] sm:$0xff] %vm1635, %v1626
      %1638 = vst.msk [vmem:[#allocation4 + $0x10] sm:$0xff] %vm1635, %v1628
      %1639 = vst.msk [vmem:[#allocation4 + $0x18] sm:$0xff] %vm1635, %v1630
      %v1640 = vld [vmem:[#allocation3] sm:$0xf]
      %v1641 = vld [vmem:[#allocation3 + $0x8] sm:$0xf]
      %v1642 = vld [vmem:[#allocation3 + $0x10] sm:$0xf]
      %v1643 = vld [vmem:[#allocation3 + $0x18] sm:$0xf]
      %v1644 = vld [vmem:[#allocation3 + $0x20] sm:$0xf]
      %v1645 = vld [vmem:[#allocation3 + $0x28] sm:$0xf]
      %v1646 = vld [vmem:[#allocation3 + $0x30] sm:$0xf]
      %v1647 = vld [vmem:[#allocation3 + $0x38] sm:$0xf]
      %v1656 = vunpack.c.l.b16 %v1640
      %v1657 = vunpack.c.l.b16 %v1641
      %v1658 = vunpack.c.l.b16 %v1642
      %v1659 = vunpack.c.l.b16 %v1643
      %v1660 = vunpack.c.l.b16 %v1644
      %v1661 = vunpack.c.l.b16 %v1645
      %v1662 = vunpack.c.l.b16 %v1646
      %v1663 = vunpack.c.l.b16 %v1647
      %v1664 = vpack.c.b16 %v1657, %v1656
      %v1665 = vpack.c.b16 %v1659, %v1658
      %v1666 = vpack.c.b16 %v1661, %v1660
      %v1667 = vpack.c.b16 %v1663, %v1662
      %1668 = vrot.lane.b32.xlu0 %v1664, 72
      %v1669 = vpop.permute.xlu0 %1668
      %1670 = vrot.lane.b32.xlu0 %v1665, 72
      %v1671 = vpop.permute.xlu0 %1670
      %1672 = vrot.lane.b32.xlu0 %v1666, 72
      %v1673 = vpop.permute.xlu0 %1672
      %1674 = vrot.lane.b32.xlu0 %v1667, 72
      %v1675 = vpop.permute.xlu0 %1674
      %vm1680 = vcmask 654944
      %1681 = vst.msk [vmem:[#allocation4] sm:$0xff] %vm1680, %v1669
      %1682 = vst.msk [vmem:[#allocation4 + $0x8] sm:$0xff] %vm1680, %v1671
      %1683 = vst.msk [vmem:[#allocation4 + $0x10] sm:$0xff] %vm1680, %v1673
      %1684 = vst.msk [vmem:[#allocation4 + $0x18] sm:$0xff] %vm1680, %v1675
      %v1685 = vld [vmem:[#allocation3] sm:$0xf]
      %v1686 = vld [vmem:[#allocation3 + $0x4] sm:$0x1]
      %v1687 = vld [vmem:[#allocation3 + $0x8] sm:$0xf]
      %v1688 = vld [vmem:[#allocation3 + $0xc] sm:$0x1]
      %v1689 = vld [vmem:[#allocation3 + $0x10] sm:$0xf]
      %v1690 = vld [vmem:[#allocation3 + $0x14] sm:$0x1]
      %v1691 = vld [vmem:[#allocation3 + $0x18] sm:$0xf]
      %v1692 = vld [vmem:[#allocation3 + $0x1c] sm:$0x1]
      %v1693 = vld [vmem:[#allocation3 + $0x20] sm:$0xf]
      %v1694 = vld [vmem:[#allocation3 + $0x24] sm:$0x1]
      %v1695 = vld [vmem:[#allocation3 + $0x28] sm:$0xf]
      %v1696 = vld [vmem:[#allocation3 + $0x2c] sm:$0x1]
      %v1697 = vld [vmem:[#allocation3 + $0x30] sm:$0xf]
      %v1698 = vld [vmem:[#allocation3 + $0x34] sm:$0x1]
      %v1699 = vld [vmem:[#allocation3 + $0x38] sm:$0xf]
      %v1700 = vld [vmem:[#allocation3 + $0x3c] sm:$0x1]
      %v1702 = vshrl.u32 %v1685, 16
      %v1704 = vrot.slane %v1702, 4
      %v1705 = vshll.u32 %v1685, 16
      %v1707 = vrot.slane %v1705, 5
      %v1708 = vor.u32 %v1704, %v1707
      %v1709 = vrot.slane %v1708, 4
      %v1711 = vshll.u32 %v1686, 16
      %v1713 = vrot.slane %v1711, 5
      %v1714 = vsel %vm765, %v1709, %v1713
      %v1716 = vshrl.u32 %v1687, 16
      %v1718 = vrot.slane %v1716, 4
      %v1719 = vshll.u32 %v1687, 16
      %v1721 = vrot.slane %v1719, 5
      %v1722 = vor.u32 %v1718, %v1721
      %v1723 = vrot.slane %v1722, 4
      %v1725 = vshll.u32 %v1688, 16
      %v1727 = vrot.slane %v1725, 5
      %v1728 = vsel %vm765, %v1723, %v1727
      %v1730 = vshrl.u32 %v1689, 16
      %v1732 = vrot.slane %v1730, 4
      %v1733 = vshll.u32 %v1689, 16
      %v1735 = vrot.slane %v1733, 5
      %v1736 = vor.u32 %v1732, %v1735
      %v1737 = vrot.slane %v1736, 4
      %v1739 = vshll.u32 %v1690, 16
      %v1741 = vrot.slane %v1739, 5
      %v1742 = vsel %vm765, %v1737, %v1741
      %v1744 = vshrl.u32 %v1691, 16
      %v1746 = vrot.slane %v1744, 4
      %v1747 = vshll.u32 %v1691, 16
      %v1749 = vrot.slane %v1747, 5
      %v1750 = vor.u32 %v1746, %v1749
      %v1751 = vrot.slane %v1750, 4
      %v1753 = vshll.u32 %v1692, 16
      %v1755 = vrot.slane %v1753, 5
      %v1756 = vsel %vm765, %v1751, %v1755
      %v1758 = vshrl.u32 %v1693, 16
      %v1760 = vrot.slane %v1758, 4
      %v1761 = vshll.u32 %v1693, 16
      %v1763 = vrot.slane %v1761, 5
      %v1764 = vor.u32 %v1760, %v1763
      %v1765 = vrot.slane %v1764, 4
      %v1767 = vshll.u32 %v1694, 16
      %v1769 = vrot.slane %v1767, 5
      %v1770 = vsel %vm765, %v1765, %v1769
      %v1772 = vshrl.u32 %v1695, 16
      %v1774 = vrot.slane %v1772, 4
      %v1775 = vshll.u32 %v1695, 16
      %v1777 = vrot.slane %v1775, 5
      %v1778 = vor.u32 %v1774, %v1777
      %v1779 = vrot.slane %v1778, 4
      %v1781 = vshll.u32 %v1696, 16
      %v1783 = vrot.slane %v1781, 5
      %v1784 = vsel %vm765, %v1779, %v1783
      %v1786 = vshrl.u32 %v1697, 16
      %v1788 = vrot.slane %v1786, 4
      %v1789 = vshll.u32 %v1697, 16
      %v1791 = vrot.slane %v1789, 5
      %v1792 = vor.u32 %v1788, %v1791
      %v1793 = vrot.slane %v1792, 4
      %v1795 = vshll.u32 %v1698, 16
      %v1797 = vrot.slane %v1795, 5
      %v1798 = vsel %vm765, %v1793, %v1797
      %v1800 = vshrl.u32 %v1699, 16
      %v1802 = vrot.slane %v1800, 4
      %v1803 = vshll.u32 %v1699, 16
      %v1805 = vrot.slane %v1803, 5
      %v1806 = vor.u32 %v1802, %v1805
      %v1807 = vrot.slane %v1806, 4
      %v1809 = vshll.u32 %v1700, 16
      %v1811 = vrot.slane %v1809, 5
      %v1812 = vsel %vm765, %v1807, %v1811
      %v1813 = vunpack.c.l.b16 %v1714
      %v1814 = vunpack.c.l.b16 %v1728
      %v1815 = vunpack.c.l.b16 %v1742
      %v1816 = vunpack.c.l.b16 %v1756
      %v1817 = vunpack.c.l.b16 %v1770
      %v1818 = vunpack.c.l.b16 %v1784
      %v1819 = vunpack.c.l.b16 %v1798
      %v1820 = vunpack.c.l.b16 %v1812
      %v1821 = vpack.c.b16 %v1814, %v1813
      %v1822 = vpack.c.b16 %v1816, %v1815
      %v1823 = vpack.c.b16 %v1818, %v1817
      %v1824 = vpack.c.b16 %v1820, %v1819
      %1825 = vrot.lane.b32.xlu0 %v1821, 80
      %v1826 = vpop.permute.xlu0 %1825
      %1827 = vrot.lane.b32.xlu0 %v1822, 80
      %v1828 = vpop.permute.xlu0 %1827
      %1829 = vrot.lane.b32.xlu0 %v1823, 80
      %v1830 = vpop.permute.xlu0 %1829
      %1831 = vrot.lane.b32.xlu0 %v1824, 80
      %v1832 = vpop.permute.xlu0 %1831
      %vm1837 = vcmask 687744
      %1838 = vst.msk [vmem:[#allocation4] sm:$0xff] %vm1837, %v1826
      %1839 = vst.msk [vmem:[#allocation4 + $0x8] sm:$0xff] %vm1837, %v1828
      %1840 = vst.msk [vmem:[#allocation4 + $0x10] sm:$0xff] %vm1837, %v1830
      %1841 = vst.msk [vmem:[#allocation4 + $0x18] sm:$0xff] %vm1837, %v1832
      %v1842 = vld [vmem:[%s584] sm:$0xf]
      %v1843 = vld [vmem:[%s584 + $0x8] sm:$0xf]
      %v1844 = vld [vmem:[%s584 + $0x10] sm:$0xf]
      %v1845 = vld [vmem:[%s584 + $0x18] sm:$0xf]
      %v1846 = vld [vmem:[%s584 + $0x20] sm:$0xf]
      %v1847 = vld [vmem:[%s584 + $0x28] sm:$0xf]
      %v1848 = vld [vmem:[%s584 + $0x30] sm:$0xf]
      %v1849 = vld [vmem:[%s584 + $0x38] sm:$0xf]
      %v1858 = vunpack.c.l.b16 %v1842
      %v1859 = vunpack.c.l.b16 %v1843
      %v1860 = vunpack.c.l.b16 %v1844
      %v1861 = vunpack.c.l.b16 %v1845
      %v1862 = vunpack.c.l.b16 %v1846
      %v1863 = vunpack.c.l.b16 %v1847
      %v1864 = vunpack.c.l.b16 %v1848
      %v1865 = vunpack.c.l.b16 %v1849
      %v1866 = vpack.c.b16 %v1859, %v1858
      %v1867 = vpack.c.b16 %v1861, %v1860
      %v1868 = vpack.c.b16 %v1863, %v1862
      %v1869 = vpack.c.b16 %v1865, %v1864
      %1870 = vrot.lane.b32.xlu0 %v1866, 84
      %v1871 = vpop.permute.xlu0 %1870
      %1872 = vrot.lane.b32.xlu0 %v1867, 84
      %v1873 = vpop.permute.xlu0 %1872
      %1874 = vrot.lane.b32.xlu0 %v1868, 84
      %v1875 = vpop.permute.xlu0 %1874
      %1876 = vrot.lane.b32.xlu0 %v1869, 84
      %v1877 = vpop.permute.xlu0 %1876
      %vm1882 = vcmask 720544
      %1883 = vst.msk [vmem:[#allocation4] sm:$0xff] %vm1882, %v1871
      %1884 = vst.msk [vmem:[#allocation4 + $0x8] sm:$0xff] %vm1882, %v1873
      %1885 = vst.msk [vmem:[#allocation4 + $0x10] sm:$0xff] %vm1882, %v1875
      %1886 = vst.msk [vmem:[#allocation4 + $0x18] sm:$0xff] %vm1882, %v1877
      %v1887 = vld [vmem:[%s584] sm:$0xf]
      %v1888 = vld [vmem:[%s584 + $0x8] sm:$0xf]
      %v1889 = vld [vmem:[%s584 + $0x10] sm:$0xf]
      %v1890 = vld [vmem:[%s584 + $0x18] sm:$0xf]
      %v1891 = vld [vmem:[%s584 + $0x20] sm:$0xf]
      %v1892 = vld [vmem:[%s584 + $0x28] sm:$0xf]
      %v1893 = vld [vmem:[%s584 + $0x30] sm:$0xf]
      %v1894 = vld [vmem:[%s584 + $0x38] sm:$0xf]
      %v1903 = vunpack.c.l.b16 %v1887
      %v1904 = vunpack.c.l.b16 %v1888
      %v1905 = vunpack.c.l.b16 %v1889
      %v1906 = vunpack.c.l.b16 %v1890
      %v1907 = vunpack.c.l.b16 %v1891
      %v1908 = vunpack.c.l.b16 %v1892
      %v1909 = vunpack.c.l.b16 %v1893
      %v1910 = vunpack.c.l.b16 %v1894
      %v1911 = vpack.c.b16 %v1904, %v1903
      %v1912 = vpack.c.b16 %v1906, %v1905
      %v1913 = vpack.c.b16 %v1908, %v1907
      %v1914 = vpack.c.b16 %v1910, %v1909
      %1915 = vrot.lane.b32.xlu0 %v1911, 84
      %v1916 = vpop.permute.xlu0 %1915
      %1917 = vrot.lane.b32.xlu0 %v1912, 84
      %v1918 = vpop.permute.xlu0 %1917
      %1919 = vrot.lane.b32.xlu0 %v1913, 84
      %v1920 = vpop.permute.xlu0 %1919
      %1921 = vrot.lane.b32.xlu0 %v1914, 84
      %v1922 = vpop.permute.xlu0 %1921
      %vm1927 = vcmask 753344
      %1928 = vst.msk [vmem:[#allocation4] sm:$0xff] %vm1927, %v1916
      %1929 = vst.msk [vmem:[#allocation4 + $0x8] sm:$0xff] %vm1927, %v1918
      %1930 = vst.msk [vmem:[#allocation4 + $0x10] sm:$0xff] %vm1927, %v1920
      %1931 = vst.msk [vmem:[#allocation4 + $0x18] sm:$0xff] %vm1927, %v1922
      %v1932 = vld [vmem:[%s584] sm:$0xf]
      %v1933 = vld [vmem:[%s584 + $0x4] sm:$0x1]
      %v1934 = vld [vmem:[%s584 + $0x8] sm:$0xf]
      %v1935 = vld [vmem:[%s584 + $0xc] sm:$0x1]
      %v1936 = vld [vmem:[%s584 + $0x10] sm:$0xf]
      %v1937 = vld [vmem:[%s584 + $0x14] sm:$0x1]
      %v1938 = vld [vmem:[%s584 + $0x18] sm:$0xf]
      %v1939 = vld [vmem:[%s584 + $0x1c] sm:$0x1]
      %v1940 = vld [vmem:[%s584 + $0x20] sm:$0xf]
      %v1941 = vld [vmem:[%s584 + $0x24] sm:$0x1]
      %v1942 = vld [vmem:[%s584 + $0x28] sm:$0xf]
      %v1943 = vld [vmem:[%s584 + $0x2c] sm:$0x1]
      %v1944 = vld [vmem:[%s584 + $0x30] sm:$0xf]
      %v1945 = vld [vmem:[%s584 + $0x34] sm:$0x1]
      %v1946 = vld [vmem:[%s584 + $0x38] sm:$0xf]
      %v1947 = vld [vmem:[%s584 + $0x3c] sm:$0x1]
      %v1949 = vshrl.u32 %v1932, 16
      %v1951 = vrot.slane %v1949, 4
      %v1952 = vshll.u32 %v1932, 16
      %v1954 = vrot.slane %v1952, 5
      %v1955 = vor.u32 %v1951, %v1954
      %v1956 = vrot.slane %v1955, 4
      %v1958 = vshll.u32 %v1933, 16
      %v1960 = vrot.slane %v1958, 5
      %v1961 = vsel %vm765, %v1956, %v1960
      %v1963 = vshrl.u32 %v1934, 16
      %v1965 = vrot.slane %v1963, 4
      %v1966 = vshll.u32 %v1934, 16
      %v1968 = vrot.slane %v1966, 5
      %v1969 = vor.u32 %v1965, %v1968
      %v1970 = vrot.slane %v1969, 4
      %v1972 = vshll.u32 %v1935, 16
      %v1974 = vrot.slane %v1972, 5
      %v1975 = vsel %vm765, %v1970, %v1974
      %v1977 = vshrl.u32 %v1936, 16
      %v1979 = vrot.slane %v1977, 4
      %v1980 = vshll.u32 %v1936, 16
      %v1982 = vrot.slane %v1980, 5
      %v1983 = vor.u32 %v1979, %v1982
      %v1984 = vrot.slane %v1983, 4
      %v1986 = vshll.u32 %v1937, 16
      %v1988 = vrot.slane %v1986, 5
      %v1989 = vsel %vm765, %v1984, %v1988
      %v1991 = vshrl.u32 %v1938, 16
      %v1993 = vrot.slane %v1991, 4
      %v1994 = vshll.u32 %v1938, 16
      %v1996 = vrot.slane %v1994, 5
      %v1997 = vor.u32 %v1993, %v1996
      %v1998 = vrot.slane %v1997, 4
      %v2000 = vshll.u32 %v1939, 16
      %v2002 = vrot.slane %v2000, 5
      %v2003 = vsel %vm765, %v1998, %v2002
      %v2005 = vshrl.u32 %v1940, 16
      %v2007 = vrot.slane %v2005, 4
      %v2008 = vshll.u32 %v1940, 16
      %v2010 = vrot.slane %v2008, 5
      %v2011 = vor.u32 %v2007, %v2010
      %v2012 = vrot.slane %v2011, 4
      %v2014 = vshll.u32 %v1941, 16
      %v2016 = vrot.slane %v2014, 5
      %v2017 = vsel %vm765, %v2012, %v2016
      %v2019 = vshrl.u32 %v1942, 16
      %v2021 = vrot.slane %v2019, 4
      %v2022 = vshll.u32 %v1942, 16
      %v2024 = vrot.slane %v2022, 5
      %v2025 = vor.u32 %v2021, %v2024
      %v2026 = vrot.slane %v2025, 4
      %v2028 = vshll.u32 %v1943, 16
      %v2030 = vrot.slane %v2028, 5
      %v2031 = vsel %vm765, %v2026, %v2030
      %v2033 = vshrl.u32 %v1944, 16
      %v2035 = vrot.slane %v2033, 4
      %v2036 = vshll.u32 %v1944, 16
      %v2038 = vrot.slane %v2036, 5
      %v2039 = vor.u32 %v2035, %v2038
      %v2040 = vrot.slane %v2039, 4
      %v2042 = vshll.u32 %v1945, 16
      %v2044 = vrot.slane %v2042, 5
      %v2045 = vsel %vm765, %v2040, %v2044
      %v2047 = vshrl.u32 %v1946, 16
      %v2049 = vrot.slane %v2047, 4
      %v2050 = vshll.u32 %v1946, 16
      %v2052 = vrot.slane %v2050, 5
      %v2053 = vor.u32 %v2049, %v2052
      %v2054 = vrot.slane %v2053, 4
      %v2056 = vshll.u32 %v1947, 16
      %v2058 = vrot.slane %v2056, 5
      %v2059 = vsel %vm765, %v2054, %v2058
      %v2060 = vunpack.c.l.b16 %v1961
      %v2061 = vunpack.c.l.b16 %v1975
      %v2062 = vunpack.c.l.b16 %v1989
      %v2063 = vunpack.c.l.b16 %v2003
      %v2064 = vunpack.c.l.b16 %v2017
      %v2065 = vunpack.c.l.b16 %v2031
      %v2066 = vunpack.c.l.b16 %v2045
      %v2067 = vunpack.c.l.b16 %v2059
      %v2068 = vpack.c.b16 %v2061, %v2060
      %v2069 = vpack.c.b16 %v2063, %v2062
      %v2070 = vpack.c.b16 %v2065, %v2064
      %v2071 = vpack.c.b16 %v2067, %v2066
      %2072 = vrot.lane.b32.xlu0 %v2068, 92
      %v2073 = vpop.permute.xlu0 %2072
      %2074 = vrot.lane.b32.xlu0 %v2069, 92
      %v2075 = vpop.permute.xlu0 %2074
      %2076 = vrot.lane.b32.xlu0 %v2070, 92
      %v2077 = vpop.permute.xlu0 %2076
      %2078 = vrot.lane.b32.xlu0 %v2071, 92
      %v2079 = vpop.permute.xlu0 %2078
      %vm2084 = vcmask 786144
      %2085 = vst.msk [vmem:[#allocation4] sm:$0xff] %vm2084, %v2073
      %2086 = vst.msk [vmem:[#allocation4 + $0x8] sm:$0xff] %vm2084, %v2075
      %2087 = vst.msk [vmem:[#allocation4 + $0x10] sm:$0xff] %vm2084, %v2077
      %2088 = vst.msk [vmem:[#allocation4 + $0x18] sm:$0xff] %vm2084, %v2079
      %s2089 = scalar_lea.vmem [#allocation3], 8
      %v2090 = vld [vmem:[%s2089] sm:$0xf]
      %v2091 = vld [vmem:[%s2089 + $0x8] sm:$0xf]
      %v2092 = vld [vmem:[%s2089 + $0x10] sm:$0xf]
      %v2093 = vld [vmem:[%s2089 + $0x18] sm:$0xf]
      %v2094 = vld [vmem:[%s2089 + $0x20] sm:$0xf]
      %v2095 = vld [vmem:[%s2089 + $0x28] sm:$0xf]
      %v2096 = vld [vmem:[%s2089 + $0x30] sm:$0xf]
      %v2097 = vld [vmem:[%s2089 + $0x38] sm:$0xf]
      %v2106 = vunpack.c.l.b16 %v2090
      %v2107 = vunpack.c.l.b16 %v2091
      %v2108 = vunpack.c.l.b16 %v2092
      %v2109 = vunpack.c.l.b16 %v2093
      %v2110 = vunpack.c.l.b16 %v2094
      %v2111 = vunpack.c.l.b16 %v2095
      %v2112 = vunpack.c.l.b16 %v2096
      %v2113 = vunpack.c.l.b16 %v2097
      %v2114 = vpack.c.b16 %v2107, %v2106
      %v2115 = vpack.c.b16 %v2109, %v2108
      %v2116 = vpack.c.b16 %v2111, %v2110
      %v2117 = vpack.c.b16 %v2113, %v2112
      %2118 = vrot.lane.b32.xlu0 %v2114, 96
      %v2119 = vpop.permute.xlu0 %2118
      %2120 = vrot.lane.b32.xlu0 %v2115, 96
      %v2121 = vpop.permute.xlu0 %2120
      %2122 = vrot.lane.b32.xlu0 %v2116, 96
      %v2123 = vpop.permute.xlu0 %2122
      %2124 = vrot.lane.b32.xlu0 %v2117, 96
      %v2125 = vpop.permute.xlu0 %2124
      %vm2130 = vcmask 818944
      %2131 = vst.msk [vmem:[#allocation4] sm:$0xff] %vm2130, %v2119
      %2132 = vst.msk [vmem:[#allocation4 + $0x8] sm:$0xff] %vm2130, %v2121
      %2133 = vst.msk [vmem:[#allocation4 + $0x10] sm:$0xff] %vm2130, %v2123
      %2134 = vst.msk [vmem:[#allocation4 + $0x18] sm:$0xff] %vm2130, %v2125
      %v2135 = vld [vmem:[%s2089] sm:$0xf]
      %v2136 = vld [vmem:[%s2089 + $0x8] sm:$0xf]
      %v2137 = vld [vmem:[%s2089 + $0x10] sm:$0xf]
      %v2138 = vld [vmem:[%s2089 + $0x18] sm:$0xf]
      %v2139 = vld [vmem:[%s2089 + $0x20] sm:$0xf]
      %v2140 = vld [vmem:[%s2089 + $0x28] sm:$0xf]
      %v2141 = vld [vmem:[%s2089 + $0x30] sm:$0xf]
      %v2142 = vld [vmem:[%s2089 + $0x38] sm:$0xf]
      %v2151 = vunpack.c.l.b16 %v2135
      %v2152 = vunpack.c.l.b16 %v2136
      %v2153 = vunpack.c.l.b16 %v2137
      %v2154 = vunpack.c.l.b16 %v2138
      %v2155 = vunpack.c.l.b16 %v2139
      %v2156 = vunpack.c.l.b16 %v2140
      %v2157 = vunpack.c.l.b16 %v2141
      %v2158 = vunpack.c.l.b16 %v2142
      %v2159 = vpack.c.b16 %v2152, %v2151
      %v2160 = vpack.c.b16 %v2154, %v2153
      %v2161 = vpack.c.b16 %v2156, %v2155
      %v2162 = vpack.c.b16 %v2158, %v2157
      %2163 = vrot.lane.b32.xlu0 %v2159, 96
      %v2164 = vpop.permute.xlu0 %2163
      %2165 = vrot.lane.b32.xlu0 %v2160, 96
      %v2166 = vpop.permute.xlu0 %2165
      %2167 = vrot.lane.b32.xlu0 %v2161, 96
      %v2168 = vpop.permute.xlu0 %2167
      %2169 = vrot.lane.b32.xlu0 %v2162, 96
      %v2170 = vpop.permute.xlu0 %2169
      %vm2175 = vcmask 851744
      %2176 = vst.msk [vmem:[#allocation4] sm:$0xff] %vm2175, %v2164
      %2177 = vst.msk [vmem:[#allocation4 + $0x8] sm:$0xff] %vm2175, %v2166
      %2178 = vst.msk [vmem:[#allocation4 + $0x10] sm:$0xff] %vm2175, %v2168
      %2179 = vst.msk [vmem:[#allocation4 + $0x18] sm:$0xff] %vm2175, %v2170
      %v2180 = vld [vmem:[%s2089] sm:$0xf]
      %v2181 = vld [vmem:[%s2089 + $0x4] sm:$0x1]
      %v2182 = vld [vmem:[%s2089 + $0x8] sm:$0xf]
      %v2183 = vld [vmem:[%s2089 + $0xc] sm:$0x1]
      %v2184 = vld [vmem:[%s2089 + $0x10] sm:$0xf]
      %v2185 = vld [vmem:[%s2089 + $0x14] sm:$0x1]
      %v2186 = vld [vmem:[%s2089 + $0x18] sm:$0xf]
      %v2187 = vld [vmem:[%s2089 + $0x1c] sm:$0x1]
      %v2188 = vld [vmem:[%s2089 + $0x20] sm:$0xf]
      %v2189 = vld [vmem:[%s2089 + $0x24] sm:$0x1]
      %v2190 = vld [vmem:[%s2089 + $0x28] sm:$0xf]
      %v2191 = vld [vmem:[%s2089 + $0x2c] sm:$0x1]
      %v2192 = vld [vmem:[%s2089 + $0x30] sm:$0xf]
      %v2193 = vld [vmem:[%s2089 + $0x34] sm:$0x1]
      %v2194 = vld [vmem:[%s2089 + $0x38] sm:$0xf]
      %v2195 = vld [vmem:[%s2089 + $0x3c] sm:$0x1]
      %v2197 = vshrl.u32 %v2180, 16
      %v2199 = vrot.slane %v2197, 4
      %v2200 = vshll.u32 %v2180, 16
      %v2202 = vrot.slane %v2200, 5
      %v2203 = vor.u32 %v2199, %v2202
      %v2204 = vrot.slane %v2203, 4
      %v2206 = vshll.u32 %v2181, 16
      %v2208 = vrot.slane %v2206, 5
      %v2209 = vsel %vm765, %v2204, %v2208
      %v2211 = vshrl.u32 %v2182, 16
      %v2213 = vrot.slane %v2211, 4
      %v2214 = vshll.u32 %v2182, 16
      %v2216 = vrot.slane %v2214, 5
      %v2217 = vor.u32 %v2213, %v2216
      %v2218 = vrot.slane %v2217, 4
      %v2220 = vshll.u32 %v2183, 16
      %v2222 = vrot.slane %v2220, 5
      %v2223 = vsel %vm765, %v2218, %v2222
      %v2225 = vshrl.u32 %v2184, 16
      %v2227 = vrot.slane %v2225, 4
      %v2228 = vshll.u32 %v2184, 16
      %v2230 = vrot.slane %v2228, 5
      %v2231 = vor.u32 %v2227, %v2230
      %v2232 = vrot.slane %v2231, 4
      %v2234 = vshll.u32 %v2185, 16
      %v2236 = vrot.slane %v2234, 5
      %v2237 = vsel %vm765, %v2232, %v2236
      %v2239 = vshrl.u32 %v2186, 16
      %v2241 = vrot.slane %v2239, 4
      %v2242 = vshll.u32 %v2186, 16
      %v2244 = vrot.slane %v2242, 5
      %v2245 = vor.u32 %v2241, %v2244
      %v2246 = vrot.slane %v2245, 4
      %v2248 = vshll.u32 %v2187, 16
      %v2250 = vrot.slane %v2248, 5
      %v2251 = vsel %vm765, %v2246, %v2250
      %v2253 = vshrl.u32 %v2188, 16
      %v2255 = vrot.slane %v2253, 4
      %v2256 = vshll.u32 %v2188, 16
      %v2258 = vrot.slane %v2256, 5
      %v2259 = vor.u32 %v2255, %v2258
      %v2260 = vrot.slane %v2259, 4
      %v2262 = vshll.u32 %v2189, 16
      %v2264 = vrot.slane %v2262, 5
      %v2265 = vsel %vm765, %v2260, %v2264
      %v2267 = vshrl.u32 %v2190, 16
      %v2269 = vrot.slane %v2267, 4
      %v2270 = vshll.u32 %v2190, 16
      %v2272 = vrot.slane %v2270, 5
      %v2273 = vor.u32 %v2269, %v2272
      %v2274 = vrot.slane %v2273, 4
      %v2276 = vshll.u32 %v2191, 16
      %v2278 = vrot.slane %v2276, 5
      %v2279 = vsel %vm765, %v2274, %v2278
      %v2281 = vshrl.u32 %v2192, 16
      %v2283 = vrot.slane %v2281, 4
      %v2284 = vshll.u32 %v2192, 16
      %v2286 = vrot.slane %v2284, 5
      %v2287 = vor.u32 %v2283, %v2286
      %v2288 = vrot.slane %v2287, 4
      %v2290 = vshll.u32 %v2193, 16
      %v2292 = vrot.slane %v2290, 5
      %v2293 = vsel %vm765, %v2288, %v2292
      %v2295 = vshrl.u32 %v2194, 16
      %v2297 = vrot.slane %v2295, 4
      %v2298 = vshll.u32 %v2194, 16
      %v2300 = vrot.slane %v2298, 5
      %v2301 = vor.u32 %v2297, %v2300
      %v2302 = vrot.slane %v2301, 4
      %v2304 = vshll.u32 %v2195, 16
      %v2306 = vrot.slane %v2304, 5
      %v2307 = vsel %vm765, %v2302, %v2306
      %v2308 = vunpack.c.l.b16 %v2209
      %v2309 = vunpack.c.l.b16 %v2223
      %v2310 = vunpack.c.l.b16 %v2237
      %v2311 = vunpack.c.l.b16 %v2251
      %v2312 = vunpack.c.l.b16 %v2265
      %v2313 = vunpack.c.l.b16 %v2279
      %v2314 = vunpack.c.l.b16 %v2293
      %v2315 = vunpack.c.l.b16 %v2307
      %v2316 = vpack.c.b16 %v2309, %v2308
      %v2317 = vpack.c.b16 %v2311, %v2310
      %v2318 = vpack.c.b16 %v2313, %v2312
      %v2319 = vpack.c.b16 %v2315, %v2314
      %2320 = vrot.lane.b32.xlu0 %v2316, 104
      %v2321 = vpop.permute.xlu0 %2320
      %2322 = vrot.lane.b32.xlu0 %v2317, 104
      %v2323 = vpop.permute.xlu0 %2322
      %2324 = vrot.lane.b32.xlu0 %v2318, 104
      %v2325 = vpop.permute.xlu0 %2324
      %2326 = vrot.lane.b32.xlu0 %v2319, 104
      %v2327 = vpop.permute.xlu0 %2326
      %vm2332 = vcmask 884544
      %2333 = vst.msk [vmem:[#allocation4] sm:$0xff] %vm2332, %v2321
      %2334 = vst.msk [vmem:[#allocation4 + $0x8] sm:$0xff] %vm2332, %v2323
      %2335 = vst.msk [vmem:[#allocation4 + $0x10] sm:$0xff] %vm2332, %v2325
      %2336 = vst.msk [vmem:[#allocation4 + $0x18] sm:$0xff] %vm2332, %v2327
      %v2337 = vld [vmem:[#allocation4] sm:$0xff]
      %v2338 = vld [vmem:[#allocation4 + $0x8] sm:$0xff]
      %v2339 = vld [vmem:[#allocation4 + $0x10] sm:$0xff]
      %v2340 = vld [vmem:[#allocation4 + $0x18] sm:$0xff]
      %v2341 = vld [vmem:[%s595] sm:$0xf]
      %v2342 = vld [vmem:[%s595 + $0x4] sm:$0xf]
      %v2343 = vld [vmem:[%s595 + $0x8] sm:$0xf]
      %v2344 = vld [vmem:[%s595 + $0xc] sm:$0xf]
      %v2345 = vld [vmem:[%s595 + $0x10] sm:$0xf]
      %v2346 = vld [vmem:[%s595 + $0x14] sm:$0xf]
      %v2347 = vld [vmem:[%s595 + $0x18] sm:$0xf]
      %v2348 = vld [vmem:[%s595 + $0x1c] sm:$0xf]
      %v2349 = vld [vmem:[%s595 + $0x20] sm:$0xf]
      %v2350 = vld [vmem:[%s595 + $0x24] sm:$0xf]
      %v2351 = vld [vmem:[%s595 + $0x28] sm:$0xf]
      %v2352 = vld [vmem:[%s595 + $0x2c] sm:$0xf]
      %v2353 = vld [vmem:[%s595 + $0x30] sm:$0xf]
      %v2354 = vld [vmem:[%s595 + $0x34] sm:$0x3]
      %v2355 = vld [vmem:[%s598] sm:$0x1]
      %v2357 = vlaneseq
      %v2358 = vshrl.u32 %v2357, 7
      %v2359 = vsub.s32 0, %v2358
      %v2360 = vrot.slane %v2355, %v2359
      %v2376 = vunpack.c.l.b16 %v2341
      %v2377 = vunpack.c.l.b16 %v2342
      %v2378 = vunpack.c.l.b16 %v2343
      %v2379 = vunpack.c.l.b16 %v2344
      %v2380 = vunpack.c.l.b16 %v2345
      %v2381 = vunpack.c.l.b16 %v2346
      %v2382 = vunpack.c.l.b16 %v2347
      %v2383 = vunpack.c.l.b16 %v2348
      %v2384 = vunpack.c.l.b16 %v2349
      %v2385 = vunpack.c.l.b16 %v2350
      %v2386 = vunpack.c.l.b16 %v2351
      %v2387 = vunpack.c.l.b16 %v2352
      %v2388 = vunpack.c.l.b16 %v2353
      %v2389 = vunpack.c.l.b16 %v2354
      %v2390 = vpack.c.b16 %v2377, %v2376
      %v2391 = vpack.c.b16 %v2379, %v2378
      %v2392 = vpack.c.b16 %v2381, %v2380
      %v2393 = vpack.c.b16 %v2383, %v2382
      %v2394 = vpack.c.b16 %v2385, %v2384
      %v2395 = vpack.c.b16 %v2387, %v2386
      %v2396 = vpack.c.b16 %v2389, %v2388
      %vm2403 = vcmask 883712
      %v2405 = vsel %vm2403, %v2337, 0
      %v2408 = vsel %vm2403, %v2338, 0
      %v2411 = vsel %vm2403, %v2339, 0
      %v2414 = vsel %vm2403, %v2340, 0
      %vm2416 = vcmask 1045504
      %v2418 = vsel %vm2416, %v2396, 0
      %2420 = vmatprep.subr.bf16.mxu0 0
      %2421 = vmatpush1.bf16.msra.mxu0 %v2390
      %2422 = vmatprep.subr.bf16.mxu0 0
      %2423 = vmatpush1.bf16.msra.mxu0 %v2391
      %2424 = vmatprep.subr.bf16.mxu0 0
      %2425 = vmatpush1.bf16.msra.mxu0 %v2392
      %2426 = vmatprep.subr.bf16.mxu0 0
      %2427 = vmatpush1.bf16.msra.mxu0 %v2393
      %2428 = vmatprep.subr.bf16.mxu0 0
      %2429 = vmatpush1.bf16.msra.mxu0 %v2394
      %2430 = vmatprep.subr.bf16.mxu0 0
      %2431 = vmatpush1.bf16.msra.mxu0 %v2395
      %2432 = vmatprep.subr.bf16.mxu0 0
      %2433 = vmatpush1.bf16.msra.mxu0 %v2418
      %2434 = vmatprep.subr.bf16.mxu0 0
      %2435 = vmatpush1.bf16.msra.mxu0 0
      %2436 = vmatprep.subr.bf16.mxu0 0
      %2437 = vmatpush1.bf16.msra.mxu0 0
      %2438 = vmatprep.subr.bf16.mxu0 0
      %2439 = vmatpush1.bf16.msra.mxu0 0
      %2440 = vmatprep.subr.bf16.mxu0 0
      %2441 = vmatpush1.bf16.msra.mxu0 0
      %2442 = vmatprep.subr.bf16.mxu0 0
      %2443 = vmatpush1.bf16.msra.mxu0 0
      %2444 = vmatprep.subr.bf16.mxu0 0
      %2445 = vmatpush1.bf16.msra.mxu0 0
      %2446 = vmatprep.subr.bf16.mxu0 0
      %2447 = vmatpush1.bf16.msra.mxu0 0
      %2448 = vmatprep.subr.bf16.mxu0 0
      %2449 = vmatpush1.bf16.msra.mxu0 0
      %2450 = vmatprep.subr.bf16.mxu0 0
      %2451 = vmatpush1.bf16.msra.mxu0 0
      %2452 = vmatprep.mubr.bf16.mxu0 0
      %2453 = vmatmul.mubr.bf16.gmra.mrb[0].mxu0 %v2405
      %v2454 = vpop.f32.mrb[0].mxu0
      %v2455 = vadd.f32 %v2360, %v2454
      %v2456 = vpop.f32.mrb[0].mxu0
      %v2457 = vpop.f32.mrb[0].mxu0
      %v2458 = vadd.f32 %v2360, %v2457
      %v2459 = vpop.f32.mrb[0].mxu0
      %2460 = vmatprep.mubr.bf16.mxu0 0
      %2461 = vmatmul.mubr.bf16.gmra.mrb[0].mxu0 %v2408
      %v2462 = vpop.f32.mrb[0].mxu0
      %v2463 = vadd.f32 %v2360, %v2462
      %v2464 = vpop.f32.mrb[0].mxu0
      %v2465 = vpop.f32.mrb[0].mxu0
      %v2466 = vadd.f32 %v2360, %v2465
      %v2467 = vpop.f32.mrb[0].mxu0
      %2468 = vmatprep.mubr.bf16.mxu0 0
      %2469 = vmatmul.mubr.bf16.gmra.mrb[0].mxu0 %v2411
      %v2470 = vpop.f32.mrb[0].mxu0
      %v2471 = vadd.f32 %v2360, %v2470
      %v2472 = vpop.f32.mrb[0].mxu0
      %v2473 = vpop.f32.mrb[0].mxu0
      %v2474 = vadd.f32 %v2360, %v2473
      %v2475 = vpop.f32.mrb[0].mxu0
      %2476 = vmatprep.mubr.bf16.mxu0 0
      %2477 = vmatmul.mubr.bf16.gmra.mrb[0].mxu0 %v2414
      %v2478 = vpop.f32.mrb[0].mxu0
      %v2479 = vadd.f32 %v2360, %v2478
      %v2480 = vpop.f32.mrb[0].mxu0
      %v2481 = vpop.f32.mrb[0].mxu0
      %v2482 = vadd.f32 %v2360, %v2481
      %v2483 = vpop.f32.mrb[0].mxu0
      %2484 = vdwg.mxu0
      %v2485 = vmax.f32 %v2455, 0.0
      %v2486 = vmax.f32 %v2458, 0.0
      %v2487 = vmax.f32 %v2463, 0.0
      %v2488 = vmax.f32 %v2466, 0.0
      %v2489 = vmax.f32 %v2471, 0.0
      %v2490 = vmax.f32 %v2474, 0.0
      %v2491 = vmax.f32 %v2479, 0.0
      %v2492 = vmax.f32 %v2482, 0.0
      %v2493 = vpack.c.bf16 %v2486, %v2485
      %v2494 = vpack.c.bf16 %v2488, %v2487
      %v2495 = vpack.c.bf16 %v2490, %v2489
      %v2496 = vpack.c.bf16 %v2492, %v2491
      %v2501 = vunpack.c.l.b16 %v2493
      %v2502 = vunpack.c.h.b16 %v2493
      %v2503 = vunpack.c.l.b16 %v2494
      %v2504 = vunpack.c.h.b16 %v2494
      %v2505 = vunpack.c.l.b16 %v2495
      %v2506 = vunpack.c.h.b16 %v2495
      %v2507 = vunpack.c.l.b16 %v2496
      %v2508 = vunpack.c.h.b16 %v2496
      %v2509 = vpack.c.b16 %v2501, %v2501
      %v2510 = vpack.c.b16 %v2502, %v2502
      %v2511 = vpack.c.b16 %v2503, %v2503
      %v2512 = vpack.c.b16 %v2504, %v2504
      %v2513 = vpack.c.b16 %v2505, %v2505
      %v2514 = vpack.c.b16 %v2506, %v2506
      %v2515 = vpack.c.b16 %v2507, %v2507
      %v2516 = vpack.c.b16 %v2508, %v2508
      %2525 = vst [vmem:[%s607] sm:$0xf] %v2509
      %2526 = vst [vmem:[%s607 + $0x4] sm:$0xf] %v2510
      %2527 = vst [vmem:[%s607 + $0x8] sm:$0xf] %v2511
      %2528 = vst [vmem:[%s607 + $0xc] sm:$0xf] %v2512
      %2529 = vst [vmem:[%s607 + $0x10] sm:$0xf] %v2513
      %2530 = vst [vmem:[%s607 + $0x14] sm:$0xf] %v2514
      %2531 = vst [vmem:[%s607 + $0x18] sm:$0xf] %v2515
      %2532 = vst [vmem:[%s607 + $0x1c] sm:$0xf] %v2516
      %p2533 = scmp.lt.s32.totalorder %s22, 1
      %s2534 = scalar_select %p2533, %s22, 1
      %p2535 = scmp.lt.s32.totalorder %s23, 0
      %s2536 = scalar_select %p2535, %s23, 0
      %s2537 = smul.addr %s2536, 8
      %s2538 = smul.addr %s2534, 8
      %s2539 = sadd.s32 %s2537, %s2538
      %s2540 = smul.addr %s2539, 4
      %s2541 = scalar_lea.vmem %s7, %s2540
      // Predicated region
      $region49: #{render_trans_forward.1} parent=47 // pred_check
        %p2542 = pneg %p250
      $region50: #{render_trans_forward.1} parent=47 // pred_check_branch
        %2544 = sbr.rel (%p2542) target = $region52
      $region51: #{render_trans_forward.1} parent=47 // pred_region
        _
      $region52: #{render_trans_forward.1} parent=47 // pred_fallthru
        _
    $region48: #{render_trans_forward.1} parent=5 // pred_fallthru
      _
    %p2545 = scmp.le.s32.totalorder 2, %s13
    // Predicated region
    $region53: #{render_trans_forward.1} parent=5 // pred_check
      %p2546 = pneg %p2545
    $region54: #{render_trans_forward.1} parent=5 // pred_check_branch
      %2548 = sbr.rel (%p2546) target = $region56
    $region55: #{render_trans_forward.1} parent=5 // pred_region
      %s2549 = ssub.s32 %s13, 2
      // Predicated region
      $region57: #{render_trans_forward.1} parent=55 // pred_check
        %p2550 = pneg %p256
      $region58: #{render_trans_forward.1} parent=55 // pred_check_branch
        %2552 = sbr.rel (%p2550) target = $region60
      $region59: #{render_trans_forward.1} parent=55 // pred_region
        %p2553 = scmp.lt.s32.totalorder %s24, 1
        %s2554 = scalar_select %p2553, %s24, 1
        %p2555 = scmp.lt.s32.totalorder %s25, 0
        %s2556 = scalar_select %p2555, %s25, 0
        %s2557 = smul.addr %s2556, 8
        %s2558 = smul.addr %s2554, 8
        %s2559 = sadd.s32 %s2557, %s2558
        %s2560 = smul.addr %s2559, 4
        %s2561 = scalar_lea.vmem %s7, %s2560
      $region60: #{render_trans_forward.1} parent=55 // pred_fallthru
        _
    $region56: #{render_trans_forward.1} parent=5 // pred_fallthru
      _
  $region6: #{render_trans_forward.1} parent=0 // loop_footer
    %s17 = sadd.s32 1, %s13
  $region7: #{render_trans_forward.1} parent=0 // loop_footer_branch
    %12 = sbr.rel target = $region3
  $region8: #{render_trans_forward.1} parent=0 // loop_exit
    _

</llo_original>
